<compile_context>
chip_gen: v7x
topology: tpu7x:2x2x1
jax: 0.10.0
libtpu: 0.0.40
codegen_flags: <defaults>
</compile_context>

<pallas_src>
import functools
import math

import jax
import jax.numpy as jnp
from jax import lax
from jax.experimental import pallas as pl
from jax.experimental.pallas import tpu as pltpu

D = 64            # feature dim (lift / splat / depth features)
H = 128           # hidden dim of the MLP heads
A = 6             # action dim
M = 16            # measurement (BEV label) dim
LOG_2PI = math.log(2.0 * math.pi)

# ---- resident weight-slab layout (rows of a (672, 128) bf16 buffer) -------- #
OFF_DEPTH_W1 = 0          # (64, 128)
OFF_DEPTH_W2 = 64         # (128, 128)
OFF_BEV_W1X = 192         # (64, 128)   feature rows of bev_pred_net layer 1
OFF_BEV_W1A = 256         # (6, 128)    action rows (padded block to 16 rows)
OFF_BEV_W2 = 272          # (128, 128)
OFF_STATE_W1X = 400       # (64, 128)
OFF_STATE_W1A = 464       # (6, 128)    (padded block to 16 rows)
OFF_STATE_W2 = 480        # (128, 128)
OFF_MEAS_WP = 608         # (64, 16) stored column-padded to (64, 128)
W_SLAB_ROWS = 672

# ---- resident bias-slab layout (rows of an (8, 128) f32 buffer) ------------ #
ROW_DEPTH_B1, ROW_DEPTH_B2 = 0, 1
ROW_BEV_B1, ROW_BEV_B2 = 2, 3
ROW_STATE_B1, ROW_STATE_B2 = 4, 5
ROW_MEAS_BP = 6


def _round_up(x, m):
    return ((x + m - 1) // m) * m


def _hw_budget():
    """Generation-aware (max_tile_rows, vmem_limit_bytes)."""
    vmem_cap = 128 * 1024 * 1024
    try:
        info = pltpu.get_tpu_info()
        cap = getattr(info, "vmem_capacity_bytes", None)
        if cap:
            vmem_cap = int(cap)
    except Exception:
        pass
    if vmem_cap <= 64 * 1024 * 1024:          # v7x-class: 64 MiB per TensorCore
        return 2048, 32 * 1024 * 1024
    return 4096, 48 * 1024 * 1024             # v5e / v6e: 128 MiB


def _choose_tiling(n, max_tile, target_tiles=4):
    """Pick a row tile: >= target_tiles grid steps (feeds both v7x TCs), <= max_tile."""
    tile = _round_up(max(1, -(-n // target_tiles)), 8)
    tile = max(8, min(max_tile, tile))
    return tile, -(-n // tile)


# ------------------------------ fused kernel ------------------------------- #

def _fused_hmm_loss_kernel(
    # gridded (TILE_N, *) f32 activation tiles
    lift_x_ref, depth_ref, splat_x_ref, meas_ref,
    splat_cur_ref, bev_true_ref, lift_cur_ref, state_true_ref, actions_ref,
    # resident parameter slabs
    w_ref,    # (672, 128) bf16
    b_ref,    # (8, 128)   f32
    # per-tile partial-sum output (1, 8, 128) f32
    out_ref,
    *, tile_n, n_valid):
    f32, bf16 = jnp.float32, jnp.bfloat16

    # Row-validity mask: the ragged tail tile contains stale-VMEM garbage rows,
    # so invalid rows must be removed with a select (never NaN * 0).
    rows = pl.program_id(0) * tile_n + lax.broadcasted_iota(jnp.int32, (tile_n, 1), 0)
    valid = rows < n_valid                                    # (tile_n, 1) bool

    actions_f = actions_ref[...]                              # (tile_n, A) f32

    def mlp(x_f32, a_f32, wx_off, wa_off, w2_off, b1_row, b2_row):
        # Linear(D[+A],H) -> ReLU -> Linear(H,2D).  bf16 MXU matmuls with f32
        # accumulation; bias add + ReLU in f32.  Casting to bf16 happens here,
        # in VMEM, so HBM only ever carries the original f32 activations.
        h = jnp.dot(x_f32.astype(bf16), w_ref[wx_off:wx_off + D, :],
                    preferred_element_type=f32)
        if a_f32 is not None:
            h = h + jnp.dot(a_f32.astype(bf16), w_ref[wa_off:wa_off + A, :],
                            preferred_element_type=f32)
        h = jnp.maximum(h + b_ref[b1_row:b1_row + 1, :], 0.0)
        return (jnp.dot(h.astype(bf16), w_ref[w2_off:w2_off + H, :],
                        preferred_element_type=f32)
                + b_ref[b2_row:b2_row + 1, :])

    # ---- depth NLL: 0.5 * sum_D[ log(2*pi) + logvar + (d - mu)^2 * exp(-logvar) ]
    # TODO(synk): logvar is not clamped (matches the PyTorch reference); exp(-logvar)
    # can overflow for untrained, large-magnitude logvar.
    p = mlp(lift_x_ref[...], None, OFF_DEPTH_W1, 0, OFF_DEPTH_W2,
            ROW_DEPTH_B1, ROW_DEPTH_B2)
    mu, lv = p[:, :D], p[:, D:]
    d = depth_ref[...]
    depth_term = LOG_2PI + lv + (d - mu) ** 2 * jnp.exp(-lv)
    depth_sum = 0.5 * jnp.sum(jnp.where(valid, depth_term, 0.0), keepdims=True)

    # ---- measurement BCE-with-logits (sum here; mean normalization in wrapper) ----
    logits = (jnp.dot(splat_x_ref[...].astype(bf16),
                      w_ref[OFF_MEAS_WP:OFF_MEAS_WP + D, :M],
                      preferred_element_type=f32)
              + b_ref[ROW_MEAS_BP:ROW_MEAS_BP + 1, :M])
    y = meas_ref[...]
    bce = jnp.maximum(logits, 0.0) - logits * y + jnp.log1p(jnp.exp(-jnp.abs(logits)))
    meas_sum = jnp.sum(jnp.where(valid, bce, 0.0), keepdims=True)

    # ---- Gaussian KL( N(q_mu, exp(q_logvar)) || N(p_mu, 1) ), summed over D ----
    def kl_head(x_f32, true_ref, wx_off, wa_off, w2_off, b1_row, b2_row):
        pp = mlp(x_f32, actions_f, wx_off, wa_off, w2_off, b1_row, b2_row)
        qm, qlv = pp[:, :D], pp[:, D:]
        kl = -qlv + 0.5 * (jnp.exp(qlv) + (qm - true_ref[...]) ** 2) - 0.5
        return jnp.sum(jnp.where(valid, kl, 0.0), keepdims=True)

    bev_sum = kl_head(splat_cur_ref[...], bev_true_ref,
                      OFF_BEV_W1X, OFF_BEV_W1A, OFF_BEV_W2, ROW_BEV_B1, ROW_BEV_B2)
    state_sum = kl_head(lift_cur_ref[...], state_true_ref,
                        OFF_STATE_W1X, OFF_STATE_W1A, OFF_STATE_W2,
                        ROW_STATE_B1, ROW_STATE_B2)

    # Scatter the four partial sums into lanes 0..3 of sublane 0 of an aligned
    # (8, 128) tile (lane-dense unmasked store; no carried accumulator so the
    # grid axis stays "parallel").
    sub = lax.broadcasted_iota(jnp.int32, (8, 128), 0)
    lane = lax.broadcasted_iota(jnp.int32, (8, 128), 1)

    def place(idx):
        return ((sub == 0) & (lane == idx)).astype(f32)

    tile = (depth_sum * place(0) + meas_sum * place(1)
            + bev_sum * place(2) + state_sum * place(3))
    out_ref[...] = tile.reshape(1, 8, 128)


# ------------------------------- parameters -------------------------------- #

def _linear_init(key, fan_in, fan_out):
    """Deterministic PyTorch-style Linear init: U(-1/sqrt(fan_in), 1/sqrt(fan_in))."""
    kw, kb = jax.random.split(key)
    bound = 1.0 / math.sqrt(fan_in)
    w = jax.random.uniform(kw, (fan_in, fan_out), jnp.float32, -bound, bound)
    b = jax.random.uniform(kb, (1, fan_out), jnp.float32, -bound, bound)
    return w, b


def init_params(key):
    keys = jax.random.split(key, 7)
    p = {}
    # depth_dist_net: Linear(64,128) -> ReLU -> Linear(128,128)
    p["depth_w1"], p["depth_b1"] = _linear_init(keys[0], D, H)
    p["depth_w2"], p["depth_b2"] = _linear_init(keys[1], H, 2 * D)
    # lazily-created measurement projection Linear(D, M)
    p["meas_wp"], p["meas_bp"] = _linear_init(keys[2], D, M)
    # bev_pred_net: Linear(70,128) -> ReLU -> Linear(128,128)
    p["bev_w1"], p["bev_b1"] = _linear_init(keys[3], D + A, H)
    p["bev_w2"], p["bev_b2"] = _linear_init(keys[4], H, 2 * D)
    # state_pred_net: Linear(70,128) -> ReLU -> Linear(128,128)
    p["state_w1"], p["state_b1"] = _linear_init(keys[5], D + A, H)
    p["state_w2"], p["state_b2"] = _linear_init(keys[6], H, 2 * D)
    # NOTE: measurement_dist_net exists in the PyTorch module but its output is
    # unused in the forward loss (dead compute), so it is omitted here.
    return p


def _pack_weight_slab(params):
    """One resident (672, 128) bf16 weight slab; tiny (~170 KiB), built per call."""
    def pad_rows(w, rows):
        return jnp.pad(w, ((0, rows - w.shape[0]), (0, 0)))

    def pad_cols(w, cols):
        return jnp.pad(w, ((0, 0), (0, cols - w.shape[1])))

    blocks = [
        params["depth_w1"],                       # rows   0:64
        params["depth_w2"],                       # rows  64:192
        params["bev_w1"][:D],                     # rows 192:256
        pad_rows(params["bev_w1"][D:], 16),       # rows 256:272  (6 used)
        params["bev_w2"],                         # rows 272:400
        params["state_w1"][:D],                   # rows 400:464
        pad_rows(params["state_w1"][D:], 16),     # rows 464:480  (6 used)
        params["state_w2"],                       # rows 480:608
        pad_cols(params["meas_wp"], 128),         # rows 608:672  (16 cols used)
    ]
    return jnp.concatenate(blocks, axis=0).astype(jnp.bfloat16)


def _pack_bias_slab(params):
    """One resident (8, 128) f32 bias slab (biases stay f32)."""
    rows = [
        params["depth_b1"], params["depth_b2"],
        params["bev_b1"], params["bev_b2"],
        params["state_b1"], params["state_b2"],
        jnp.pad(params["meas_bp"], ((0, 0), (0, 128 - M))),
        jnp.zeros((1, 128), jnp.float32),
    ]
    return jnp.concatenate(rows, axis=0).astype(jnp.float32)


# --------------------------------- forward --------------------------------- #

def hmm_loss_forward(params, lift_features, depth_features, splat_features, measurements,
                     lift_next, splat_current, actions, splat_next_true, observations,
                     lift_current, lift_next_true,
                     depth_weight=1.0, measurement_weight=1.0,
                     bev_kl_weight=0.5, state_kl_weight=0.5):
    del lift_next, observations  # unused by the reference forward as well
    flat = lambda t: t.reshape(-1, t.shape[-1]).astype(jnp.float32)

    # Original f32 activations go straight to the kernel (no bf16 copies, no
    # [x|actions] concat — the kernel casts and splits the W1 matmuls instead).
    # TODO(synk): if upstream producers can emit labels (depth/bev/state targets,
    # measurements) in bf16, read them as bf16 here to cut HBM bytes ~28%.
    acts = [
        flat(lift_features), flat(depth_features), flat(splat_features),
        flat(measurements), flat(splat_current), flat(splat_next_true),
        flat(lift_current), flat(lift_next_true), flat(actions),
    ]
    n = acts[0].shape[0]

    max_tile, vmem_limit = _hw_budget()

    # Only pad rows to a sublane multiple of 8 when needed (normally a no-op);
    # never pad to a full tile multiple (that would copy every array in HBM).
    n_pad = _round_up(n, 8)
    if n_pad != n:
        acts = [jnp.pad(a, ((0, n_pad - n), (0, 0))) for a in acts]
    tile_n, num_tiles = _choose_tiling(n_pad, max_tile)

    w_slab = _pack_weight_slab(params)
    b_slab = _pack_bias_slab(params)

    row = lambda dim: pl.BlockSpec((tile_n, dim), lambda i: (i, 0))
    resident = lambda shape: pl.BlockSpec(shape, lambda i: (0, 0))
    in_specs = [row(D), row(D), row(D), row(M), row(D), row(D), row(D), row(D), row(A),
                resident((W_SLAB_ROWS, 128)), resident((8, 128))]

    flops = 2 * n_pad * (D * H + H * 2 * D + D * M + 2 * (D * H + A * H + H * 2 * D))
    transcendentals = n_pad * (3 * D + 2 * M)
    bytes_accessed = (sum(int(a.size) * a.dtype.itemsize for a in acts)
                      + int(w_slab.size) * 2 + int(b_slab.size) * 4
                      + num_tiles * 8 * 128 * 4)

    out = pl.pallas_call(
        functools.partial(_fused_hmm_loss_kernel, tile_n=tile_n, n_valid=n),
        out_shape=jax.ShapeDtypeStruct((num_tiles, 8, 128), jnp.float32),
        grid_spec=pltpu.PrefetchScalarGridSpec(
            num_scalar_prefetch=0,
            grid=(num_tiles,),
            in_specs=in_specs,
            out_specs=pl.BlockSpec((1, 8, 128), lambda i: (i, 0, 0)),
        ),
        compiler_params=pltpu.CompilerParams(
            dimension_semantics=("parallel",),
            vmem_limit_bytes=vmem_limit,
        ),
        cost_estimate=pl.CostEstimate(flops=flops, transcendentals=transcendentals,
                                      bytes_accessed=bytes_accessed),
    )(*acts, w_slab, b_slab)

    partials = jnp.sum(out, axis=(0, 1))          # (128,), lanes 0..3 nonzero
    depth_loss = partials[0] / n
    measurement_loss = partials[1] / (n * M)
    bev_kl_loss = partials[2] / n
    state_kl_loss = partials[3] / n

    total = (depth_weight * depth_loss + measurement_weight * measurement_loss
             + bev_kl_weight * bev_kl_loss + state_kl_weight * state_kl_loss)
    return {
        "depth_loss": depth_loss,
        "measurement_loss": measurement_loss,
        "bev_kl_loss": bev_kl_loss,
        "state_kl_loss": state_kl_loss,
        "total_loss": total,
    }


# ----------------------------- pure-JAX reference --------------------------- #

def _reference(params, args):
    flat = lambda t: t.reshape(-1, t.shape[-1]).astype(jnp.float32)
    (lift_f, depth_f, splat_f, meas, _lift_next, splat_cur, actions, splat_next_true,
     _obs, lift_cur, lift_next_true) = [flat(a) for a in args]

    def mlp(x, w1, b1, w2, b2):
        return jnp.maximum(x @ w1 + b1, 0.0) @ w2 + b2

    p = mlp(lift_f, params["depth_w1"], params["depth_b1"],
            params["depth_w2"], params["depth_b2"])
    mu, lv = p[:, :D], p[:, D:]
    depth_loss = 0.5 * jnp.mean(
        jnp.sum(LOG_2PI + lv + (depth_f - mu) ** 2 * jnp.exp(-lv), axis=-1))

    logits = splat_f @ params["meas_wp"] + params["meas_bp"]
    meas_loss = jnp.mean(jnp.maximum(logits, 0.0) - logits * meas
                         + jnp.log1p(jnp.exp(-jnp.abs(logits))))

    def kl(x, a, true_mu, w1, b1, w2, b2):
        pp = mlp(jnp.concatenate([x, a], axis=-1), w1, b1, w2, b2)
        qm, qlv = pp[:, :D], pp[:, D:]
        return jnp.mean(jnp.sum(-qlv + 0.5 * (jnp.exp(qlv) + (qm - true_mu) ** 2) - 0.5,
                                axis=-1))

    bev = kl(splat_cur, actions, splat_next_true, params["bev_w1"], params["bev_b1"],
             params["bev_w2"], params["bev_b2"])
    st = kl(lift_cur, actions, lift_next_true, params["state_w1"], params["state_b1"],
            params["state_w2"], params["state_b2"])
    return {"depth_loss": depth_loss, "measurement_loss": meas_loss, "bev_kl_loss": bev,
            "state_kl_loss": st,
            "total_loss": depth_loss + meas_loss + 0.5 * bev + 0.5 * st}


# ----------------------------------- main ----------------------------------- #

if __name__ == "__main__":
    B, T = 2, 8
    key = jax.random.PRNGKey(0)
    kp, *ks = jax.random.split(key, 13)
    params = init_params(kp)

    lift_features = 0.1 * jax.random.normal(ks[0], (B, T, D), jnp.float32)
    depth_features = 0.1 * jax.random.normal(ks[1], (B, T, D), jnp.float32)
    splat_features = 0.1 * jax.random.normal(ks[2], (B, T, D), jnp.float32)
    measurements = jax.random.bernoulli(ks[3], 0.5, (B, T, M)).astype(jnp.float32)
    lift_next = 0.1 * jax.random.normal(ks[4], (B, T, D), jnp.float32)       # unused
    splat_current = 0.1 * jax.random.normal(ks[5], (B, T, D), jnp.float32)
    actions = 0.1 * jax.random.normal(ks[6], (B, T, A), jnp.float32)
    splat_next_true = 0.1 * jax.random.normal(ks[7], (B, T, D), jnp.float32)
    observations = 0.1 * jax.random.normal(ks[8], (B, T, D), jnp.float32)    # unused
    lift_current = 0.1 * jax.random.normal(ks[9], (B, T, D), jnp.float32)
    lift_next_true = 0.1 * jax.random.normal(ks[10], (B, T, D), jnp.float32)

    args = (lift_features, depth_features, splat_features, measurements, lift_next,
            splat_current, actions, splat_next_true, observations, lift_current,
            lift_next_true)

    losses = jax.jit(hmm_loss_forward)(params, *args)
    losses = jax.block_until_ready(losses)

    ref = _reference(params, args)
    for k in losses:
        # bf16 matmul operands vs pure-f32 reference -> tolerance relaxed to 2e-2.
        assert jnp.allclose(losses[k], ref[k], rtol=2e-2, atol=2e-2), (
            f"mismatch in {k}: {losses[k]} vs {ref[k]}")

    print("KERNEL_OK")
</pallas_src>

<mosaic_0001>
module attributes {stable_mosaic.version = 11 : i64} {
  func.func @_fused_hmm_loss_kernel(%arg0: i32, %arg1: memref<8x64xf32, #tpu.memory_space<vmem>>, %arg2: memref<8x64xf32, #tpu.memory_space<vmem>>, %arg3: memref<8x64xf32, #tpu.memory_space<vmem>>, %arg4: memref<8x16xf32, #tpu.memory_space<vmem>>, %arg5: memref<8x64xf32, #tpu.memory_space<vmem>>, %arg6: memref<8x64xf32, #tpu.memory_space<vmem>>, %arg7: memref<8x64xf32, #tpu.memory_space<vmem>>, %arg8: memref<8x64xf32, #tpu.memory_space<vmem>>, %arg9: memref<8x6xf32, #tpu.memory_space<vmem>>, %arg10: memref<672x128xbf16, #tpu.memory_space<vmem>>, %arg11: memref<8x128xf32, #tpu.memory_space<vmem>>, %arg12: memref<1x8x128xf32, #tpu.memory_space<vmem>>) attributes {dimension_semantics = [#tpu.dimension_semantics<parallel>], iteration_bounds = array<i64: 2>, scalar_prefetch = 0 : i64, scratch_operands = 0 : i64, tpu.core_type = #tpu.core_type<tc>, window_params = [{transform_indices = @transform_0, window_bounds = array<i64: 8, 64>}, {transform_indices = @transform_1, window_bounds = array<i64: 8, 64>}, {transform_indices = @transform_2, window_bounds = array<i64: 8, 64>}, {transform_indices = @transform_3, window_bounds = array<i64: 8, 16>}, {transform_indices = @transform_4, window_bounds = array<i64: 8, 64>}, {transform_indices = @transform_5, window_bounds = array<i64: 8, 64>}, {transform_indices = @transform_6, window_bounds = array<i64: 8, 64>}, {transform_indices = @transform_7, window_bounds = array<i64: 8, 64>}, {transform_indices = @transform_8, window_bounds = array<i64: 8, 6>}, {pipeline_mode = #tpu.pipeline_mode<synchronous>, transform_indices = @transform_9, window_bounds = array<i64: 672, 128>}, {pipeline_mode = #tpu.pipeline_mode<synchronous>, transform_indices = @transform_10, window_bounds = array<i64: 8, 128>}, {transform_indices = @transform_11, window_bounds = array<i64: 1, 8, 128>}]} {
    %c8_i32 = arith.constant 8 : i32
    %0 = arith.muli %arg0, %c8_i32 : i32
    %1 = tpu.iota {dimensions = array<i32: 0>} : vector<8x1xi32>
    %2 = vector.broadcast %0 : i32 to vector<8x1xi32>
    %3 = arith.addi %2, %1 : vector<8x1xi32>
    %c16_i32 = arith.constant 16 : i32
    %4 = vector.broadcast %c16_i32 : i32 to vector<8x1xi32>
    %5 = arith.cmpi slt, %3, %4 : vector<8x1xi32>
    %c0 = arith.constant 0 : index
    %c0_0 = arith.constant 0 : index
    %6 = vector.load %arg9[%c0, %c0_0] : memref<8x6xf32, #tpu.memory_space<vmem>>, vector<8x6xf32>
    %c0_1 = arith.constant 0 : index
    %c0_2 = arith.constant 0 : index
    %7 = vector.load %arg1[%c0_1, %c0_2] : memref<8x64xf32, #tpu.memory_space<vmem>>, vector<8x64xf32>
    %8 = arith.truncf %7 : vector<8x64xf32> to vector<8x64xbf16>
    %c0_3 = arith.constant 0 : index
    %c0_4 = arith.constant 0 : index
    %9 = vector.load %arg10[%c0_3, %c0_4] : memref<672x128xbf16, #tpu.memory_space<vmem>>, vector<64x128xbf16>
    %cst = arith.constant dense<0.000000e+00> : vector<8x128xf32>
    %10 = tpu.matmul %8, %9, %cst {dimension_numbers = #tpu.dot_dimension_numbers<[1], [0], [0], [1], [0, 0, 1, 1], [], []>} : vector<8x64xbf16>, vector<64x128xbf16>, vector<8x128xf32> -> vector<8x128xf32>
    %c0_5 = arith.constant 0 : index
    %c0_6 = arith.constant 0 : index
    %11 = vector.load %arg11[%c0_5, %c0_6] : memref<8x128xf32, #tpu.memory_space<vmem>>, vector<1x128xf32>
    %12 = vector.broadcast %11 : vector<1x128xf32> to vector<8x128xf32>
    %13 = arith.addf %10, %12 : vector<8x128xf32>
    %cst_7 = arith.constant 0.000000e+00 : f32
    %14 = vector.broadcast %cst_7 : f32 to vector<8x128xf32>
    %15 = arith.maximumf %13, %14 : vector<8x128xf32>
    %16 = arith.truncf %15 : vector<8x128xf32> to vector<8x128xbf16>
    %c64 = arith.constant 64 : index
    %c0_8 = arith.constant 0 : index
    %17 = vector.load %arg10[%c64, %c0_8] : memref<672x128xbf16, #tpu.memory_space<vmem>>, vector<128x128xbf16>
    %cst_9 = arith.constant dense<0.000000e+00> : vector<8x128xf32>
    %18 = tpu.matmul %16, %17, %cst_9 {dimension_numbers = #tpu.dot_dimension_numbers<[1], [0], [0], [1], [0, 0, 1, 1], [], []>} : vector<8x128xbf16>, vector<128x128xbf16>, vector<8x128xf32> -> vector<8x128xf32>
    %c1 = arith.constant 1 : index
    %c0_10 = arith.constant 0 : index
    %19 = vector.load %arg11[%c1, %c0_10] : memref<8x128xf32, #tpu.memory_space<vmem>>, vector<1x128xf32>
    %20 = vector.broadcast %19 : vector<1x128xf32> to vector<8x128xf32>
    %21 = arith.addf %18, %20 : vector<8x128xf32>
    %22 = vector.extract_strided_slice %21 {offsets = [0, 0], sizes = [8, 64], strides = [1, 1]} : vector<8x128xf32> to vector<8x64xf32>
    %23 = vector.extract_strided_slice %21 {offsets = [0, 64], sizes = [8, 64], strides = [1, 1]} : vector<8x128xf32> to vector<8x64xf32>
    %c0_11 = arith.constant 0 : index
    %c0_12 = arith.constant 0 : index
    %24 = vector.load %arg2[%c0_11, %c0_12] : memref<8x64xf32, #tpu.memory_space<vmem>>, vector<8x64xf32>
    %cst_13 = arith.constant 1.83787704 : f32
    %25 = vector.broadcast %cst_13 : f32 to vector<8x64xf32>
    %26 = arith.addf %25, %23 : vector<8x64xf32>
    %27 = arith.subf %24, %22 : vector<8x64xf32>
    %28 = arith.mulf %27, %27 : vector<8x64xf32>
    %cst_14 = arith.constant 0.000000e+00 : f32
    %29 = vector.broadcast %cst_14 : f32 to vector<8x64xf32>
    %30 = arith.subf %29, %23 : vector<8x64xf32>
    %31 = math.exp %30 : vector<8x64xf32>
    %32 = arith.mulf %28, %31 : vector<8x64xf32>
    %33 = arith.addf %26, %32 : vector<8x64xf32>
    %cst_15 = arith.constant 0.000000e+00 : f32
    %34 = vector.shape_cast %5 : vector<8x1xi1> to vector<8x1xi1>
    %35 = vector.broadcast %34 : vector<8x1xi1> to vector<8x64xi1>
    %36 = vector.broadcast %cst_15 : f32 to vector<8x64xf32>
    %37 = arith.select %35, %33, %36 : vector<8x64xi1>, vector<8x64xf32>
    %38 = vector.shape_cast %37 : vector<8x64xf32> to vector<1x8x64xf32>
    %cst_16 = arith.constant dense<0.000000e+00> : vector<1xf32>
    %39 = vector.multi_reduction <add>, %38, %cst_16 [1, 2] : vector<1x8x64xf32> to vector<1xf32>
    %40 = vector.shape_cast %39 : vector<1xf32> to vector<1x1x1xf32>
    %41 = vector.extract %40[0, 0, 0] : f32 from vector<1x1x1xf32>
    %42 = vector.broadcast %41 : f32 to vector<1x1xf32>
    %cst_17 = arith.constant 5.000000e-01 : f32
    %43 = vector.broadcast %cst_17 : f32 to vector<1x1xf32>
    %44 = arith.mulf %43, %42 : vector<1x1xf32>
    %c0_18 = arith.constant 0 : index
    %c0_19 = arith.constant 0 : index
    %45 = vector.load %arg3[%c0_18, %c0_19] : memref<8x64xf32, #tpu.memory_space<vmem>>, vector<8x64xf32>
    %46 = arith.truncf %45 : vector<8x64xf32> to vector<8x64xbf16>
    %c608 = arith.constant 608 : index
    %c0_20 = arith.constant 0 : index
    %47 = vector.load %arg10[%c608, %c0_20] : memref<672x128xbf16, #tpu.memory_space<vmem>>, vector<64x16xbf16>
    %cst_21 = arith.constant dense<0.000000e+00> : vector<8x16xf32>
    %48 = tpu.matmul %46, %47, %cst_21 {dimension_numbers = #tpu.dot_dimension_numbers<[1], [0], [0], [1], [0, 0, 1, 1], [], []>} : vector<8x64xbf16>, vector<64x16xbf16>, vector<8x16xf32> -> vector<8x16xf32>
    %c6 = arith.constant 6 : index
    %c0_22 = arith.constant 0 : index
    %49 = vector.load %arg11[%c6, %c0_22] : memref<8x128xf32, #tpu.memory_space<vmem>>, vector<1x16xf32>
    %50 = vector.broadcast %49 : vector<1x16xf32> to vector<8x16xf32>
    %51 = arith.addf %48, %50 : vector<8x16xf32>
    %c0_23 = arith.constant 0 : index
    %c0_24 = arith.constant 0 : index
    %52 = vector.load %arg4[%c0_23, %c0_24] : memref<8x16xf32, #tpu.memory_space<vmem>>, vector<8x16xf32>
    %cst_25 = arith.constant 0.000000e+00 : f32
    %53 = vector.broadcast %cst_25 : f32 to vector<8x16xf32>
    %54 = arith.maximumf %51, %53 : vector<8x16xf32>
    %55 = arith.mulf %51, %52 : vector<8x16xf32>
    %56 = arith.subf %54, %55 : vector<8x16xf32>
    %57 = math.absf %51 : vector<8x16xf32>
    %cst_26 = arith.constant 0.000000e+00 : f32
    %58 = vector.broadcast %cst_26 : f32 to vector<8x16xf32>
    %59 = arith.subf %58, %57 : vector<8x16xf32>
    %60 = math.exp %59 : vector<8x16xf32>
    %61 = math.log1p %60 : vector<8x16xf32>
    %62 = arith.addf %56, %61 : vector<8x16xf32>
    %cst_27 = arith.constant 0.000000e+00 : f32
    %63 = vector.shape_cast %5 : vector<8x1xi1> to vector<8x1xi1>
    %64 = vector.broadcast %63 : vector<8x1xi1> to vector<8x16xi1>
    %65 = vector.broadcast %cst_27 : f32 to vector<8x16xf32>
    %66 = arith.select %64, %62, %65 : vector<8x16xi1>, vector<8x16xf32>
    %67 = vector.shape_cast %66 : vector<8x16xf32> to vector<1x8x16xf32>
    %cst_28 = arith.constant dense<0.000000e+00> : vector<1xf32>
    %68 = vector.multi_reduction <add>, %67, %cst_28 [1, 2] : vector<1x8x16xf32> to vector<1xf32>
    %69 = vector.shape_cast %68 : vector<1xf32> to vector<1x1x1xf32>
    %70 = vector.extract %69[0, 0, 0] : f32 from vector<1x1x1xf32>
    %71 = vector.broadcast %70 : f32 to vector<1x1xf32>
    %c0_29 = arith.constant 0 : index
    %c0_30 = arith.constant 0 : index
    %72 = vector.load %arg5[%c0_29, %c0_30] : memref<8x64xf32, #tpu.memory_space<vmem>>, vector<8x64xf32>
    %73 = arith.truncf %72 : vector<8x64xf32> to vector<8x64xbf16>
    %c192 = arith.constant 192 : index
    %c0_31 = arith.constant 0 : index
    %74 = vector.load %arg10[%c192, %c0_31] : memref<672x128xbf16, #tpu.memory_space<vmem>>, vector<64x128xbf16>
    %cst_32 = arith.constant dense<0.000000e+00> : vector<8x128xf32>
    %75 = tpu.matmul %73, %74, %cst_32 {dimension_numbers = #tpu.dot_dimension_numbers<[1], [0], [0], [1], [0, 0, 1, 1], [], []>} : vector<8x64xbf16>, vector<64x128xbf16>, vector<8x128xf32> -> vector<8x128xf32>
    %76 = arith.truncf %6 : vector<8x6xf32> to vector<8x6xbf16>
    %c256 = arith.constant 256 : index
    %c0_33 = arith.constant 0 : index
    %77 = vector.load %arg10[%c256, %c0_33] : memref<672x128xbf16, #tpu.memory_space<vmem>>, vector<6x128xbf16>
    %cst_34 = arith.constant dense<0.000000e+00> : vector<8x128xf32>
    %78 = tpu.matmul %76, %77, %cst_34 {dimension_numbers = #tpu.dot_dimension_numbers<[1], [0], [0], [1], [0, 0, 1, 1], [], []>} : vector<8x6xbf16>, vector<6x128xbf16>, vector<8x128xf32> -> vector<8x128xf32>
    %79 = arith.addf %75, %78 : vector<8x128xf32>
    %c2 = arith.constant 2 : index
    %c0_35 = arith.constant 0 : index
    %80 = vector.load %arg11[%c2, %c0_35] : memref<8x128xf32, #tpu.memory_space<vmem>>, vector<1x128xf32>
    %81 = vector.broadcast %80 : vector<1x128xf32> to vector<8x128xf32>
    %82 = arith.addf %79, %81 : vector<8x128xf32>
    %cst_36 = arith.constant 0.000000e+00 : f32
    %83 = vector.broadcast %cst_36 : f32 to vector<8x128xf32>
    %84 = arith.maximumf %82, %83 : vector<8x128xf32>
    %85 = arith.truncf %84 : vector<8x128xf32> to vector<8x128xbf16>
    %c272 = arith.constant 272 : index
    %c0_37 = arith.constant 0 : index
    %86 = vector.load %arg10[%c272, %c0_37] : memref<672x128xbf16, #tpu.memory_space<vmem>>, vector<128x128xbf16>
    %cst_38 = arith.constant dense<0.000000e+00> : vector<8x128xf32>
    %87 = tpu.matmul %85, %86, %cst_38 {dimension_numbers = #tpu.dot_dimension_numbers<[1], [0], [0], [1], [0, 0, 1, 1], [], []>} : vector<8x128xbf16>, vector<128x128xbf16>, vector<8x128xf32> -> vector<8x128xf32>
    %c3 = arith.constant 3 : index
    %c0_39 = arith.constant 0 : index
    %88 = vector.load %arg11[%c3, %c0_39] : memref<8x128xf32, #tpu.memory_space<vmem>>, vector<1x128xf32>
    %89 = vector.broadcast %88 : vector<1x128xf32> to vector<8x128xf32>
    %90 = arith.addf %87, %89 : vector<8x128xf32>
    %91 = vector.extract_strided_slice %90 {offsets = [0, 0], sizes = [8, 64], strides = [1, 1]} : vector<8x128xf32> to vector<8x64xf32>
    %92 = vector.extract_strided_slice %90 {offsets = [0, 64], sizes = [8, 64], strides = [1, 1]} : vector<8x128xf32> to vector<8x64xf32>
    %cst_40 = arith.constant 0.000000e+00 : f32
    %93 = vector.broadcast %cst_40 : f32 to vector<8x64xf32>
    %94 = arith.subf %93, %92 : vector<8x64xf32>
    %95 = math.exp %92 : vector<8x64xf32>
    %c0_41 = arith.constant 0 : index
    %c0_42 = arith.constant 0 : index
    %96 = vector.load %arg6[%c0_41, %c0_42] : memref<8x64xf32, #tpu.memory_space<vmem>>, vector<8x64xf32>
    %97 = arith.subf %91, %96 : vector<8x64xf32>
    %98 = arith.mulf %97, %97 : vector<8x64xf32>
    %99 = arith.addf %95, %98 : vector<8x64xf32>
    %cst_43 = arith.constant 5.000000e-01 : f32
    %100 = vector.broadcast %cst_43 : f32 to vector<8x64xf32>
    %101 = arith.mulf %100, %99 : vector<8x64xf32>
    %102 = arith.addf %94, %101 : vector<8x64xf32>
    %cst_44 = arith.constant 5.000000e-01 : f32
    %103 = vector.broadcast %cst_44 : f32 to vector<8x64xf32>
    %104 = arith.subf %102, %103 : vector<8x64xf32>
    %cst_45 = arith.constant 0.000000e+00 : f32
    %105 = vector.shape_cast %5 : vector<8x1xi1> to vector<8x1xi1>
    %106 = vector.broadcast %105 : vector<8x1xi1> to vector<8x64xi1>
    %107 = vector.broadcast %cst_45 : f32 to vector<8x64xf32>
    %108 = arith.select %106, %104, %107 : vector<8x64xi1>, vector<8x64xf32>
    %109 = vector.shape_cast %108 : vector<8x64xf32> to vector<1x8x64xf32>
    %cst_46 = arith.constant dense<0.000000e+00> : vector<1xf32>
    %110 = vector.multi_reduction <add>, %109, %cst_46 [1, 2] : vector<1x8x64xf32> to vector<1xf32>
    %111 = vector.shape_cast %110 : vector<1xf32> to vector<1x1x1xf32>
    %112 = vector.extract %111[0, 0, 0] : f32 from vector<1x1x1xf32>
    %113 = vector.broadcast %112 : f32 to vector<1x1xf32>
    %c0_47 = arith.constant 0 : index
    %c0_48 = arith.constant 0 : index
    %114 = vector.load %arg7[%c0_47, %c0_48] : memref<8x64xf32, #tpu.memory_space<vmem>>, vector<8x64xf32>
    %115 = arith.truncf %114 : vector<8x64xf32> to vector<8x64xbf16>
    %c400 = arith.constant 400 : index
    %c0_49 = arith.constant 0 : index
    %116 = vector.load %arg10[%c400, %c0_49] : memref<672x128xbf16, #tpu.memory_space<vmem>>, vector<64x128xbf16>
    %cst_50 = arith.constant dense<0.000000e+00> : vector<8x128xf32>
    %117 = tpu.matmul %115, %116, %cst_50 {dimension_numbers = #tpu.dot_dimension_numbers<[1], [0], [0], [1], [0, 0, 1, 1], [], []>} : vector<8x64xbf16>, vector<64x128xbf16>, vector<8x128xf32> -> vector<8x128xf32>
    %118 = arith.truncf %6 : vector<8x6xf32> to vector<8x6xbf16>
    %c464 = arith.constant 464 : index
    %c0_51 = arith.constant 0 : index
    %119 = vector.load %arg10[%c464, %c0_51] : memref<672x128xbf16, #tpu.memory_space<vmem>>, vector<6x128xbf16>
    %cst_52 = arith.constant dense<0.000000e+00> : vector<8x128xf32>
    %120 = tpu.matmul %118, %119, %cst_52 {dimension_numbers = #tpu.dot_dimension_numbers<[1], [0], [0], [1], [0, 0, 1, 1], [], []>} : vector<8x6xbf16>, vector<6x128xbf16>, vector<8x128xf32> -> vector<8x128xf32>
    %121 = arith.addf %117, %120 : vector<8x128xf32>
    %c4 = arith.constant 4 : index
    %c0_53 = arith.constant 0 : index
    %122 = vector.load %arg11[%c4, %c0_53] : memref<8x128xf32, #tpu.memory_space<vmem>>, vector<1x128xf32>
    %123 = vector.broadcast %122 : vector<1x128xf32> to vector<8x128xf32>
    %124 = arith.addf %121, %123 : vector<8x128xf32>
    %cst_54 = arith.constant 0.000000e+00 : f32
    %125 = vector.broadcast %cst_54 : f32 to vector<8x128xf32>
    %126 = arith.maximumf %124, %125 : vector<8x128xf32>
    %127 = arith.truncf %126 : vector<8x128xf32> to vector<8x128xbf16>
    %c480 = arith.constant 480 : index
    %c0_55 = arith.constant 0 : index
    %128 = vector.load %arg10[%c480, %c0_55] : memref<672x128xbf16, #tpu.memory_space<vmem>>, vector<128x128xbf16>
    %cst_56 = arith.constant dense<0.000000e+00> : vector<8x128xf32>
    %129 = tpu.matmul %127, %128, %cst_56 {dimension_numbers = #tpu.dot_dimension_numbers<[1], [0], [0], [1], [0, 0, 1, 1], [], []>} : vector<8x128xbf16>, vector<128x128xbf16>, vector<8x128xf32> -> vector<8x128xf32>
    %c5 = arith.constant 5 : index
    %c0_57 = arith.constant 0 : index
    %130 = vector.load %arg11[%c5, %c0_57] : memref<8x128xf32, #tpu.memory_space<vmem>>, vector<1x128xf32>
    %131 = vector.broadcast %130 : vector<1x128xf32> to vector<8x128xf32>
    %132 = arith.addf %129, %131 : vector<8x128xf32>
    %133 = vector.extract_strided_slice %132 {offsets = [0, 0], sizes = [8, 64], strides = [1, 1]} : vector<8x128xf32> to vector<8x64xf32>
    %134 = vector.extract_strided_slice %132 {offsets = [0, 64], sizes = [8, 64], strides = [1, 1]} : vector<8x128xf32> to vector<8x64xf32>
    %cst_58 = arith.constant 0.000000e+00 : f32
    %135 = vector.broadcast %cst_58 : f32 to vector<8x64xf32>
    %136 = arith.subf %135, %134 : vector<8x64xf32>
    %137 = math.exp %134 : vector<8x64xf32>
    %c0_59 = arith.constant 0 : index
    %c0_60 = arith.constant 0 : index
    %138 = vector.load %arg8[%c0_59, %c0_60] : memref<8x64xf32, #tpu.memory_space<vmem>>, vector<8x64xf32>
    %139 = arith.subf %133, %138 : vector<8x64xf32>
    %140 = arith.mulf %139, %139 : vector<8x64xf32>
    %141 = arith.addf %137, %140 : vector<8x64xf32>
    %cst_61 = arith.constant 5.000000e-01 : f32
    %142 = vector.broadcast %cst_61 : f32 to vector<8x64xf32>
    %143 = arith.mulf %142, %141 : vector<8x64xf32>
    %144 = arith.addf %136, %143 : vector<8x64xf32>
    %cst_62 = arith.constant 5.000000e-01 : f32
    %145 = vector.broadcast %cst_62 : f32 to vector<8x64xf32>
    %146 = arith.subf %144, %145 : vector<8x64xf32>
    %cst_63 = arith.constant 0.000000e+00 : f32
    %147 = vector.shape_cast %5 : vector<8x1xi1> to vector<8x1xi1>
    %148 = vector.broadcast %147 : vector<8x1xi1> to vector<8x64xi1>
    %149 = vector.broadcast %cst_63 : f32 to vector<8x64xf32>
    %150 = arith.select %148, %146, %149 : vector<8x64xi1>, vector<8x64xf32>
    %151 = vector.shape_cast %150 : vector<8x64xf32> to vector<1x8x64xf32>
    %cst_64 = arith.constant dense<0.000000e+00> : vector<1xf32>
    %152 = vector.multi_reduction <add>, %151, %cst_64 [1, 2] : vector<1x8x64xf32> to vector<1xf32>
    %153 = vector.shape_cast %152 : vector<1xf32> to vector<1x1x1xf32>
    %154 = vector.extract %153[0, 0, 0] : f32 from vector<1x1x1xf32>
    %155 = vector.broadcast %154 : f32 to vector<1x1xf32>
    %156 = tpu.iota {dimensions = array<i32: 0>} : vector<8x128xi32>
    %157 = tpu.iota {dimensions = array<i32: 1>} : vector<8x128xi32>
    %c0_i32 = arith.constant 0 : i32
    %158 = vector.broadcast %c0_i32 : i32 to vector<8x128xi32>
    %159 = arith.cmpi eq, %156, %158 : vector<8x128xi32>
    %c0_i32_65 = arith.constant 0 : i32
    %160 = vector.broadcast %c0_i32_65 : i32 to vector<8x128xi32>
    %161 = arith.cmpi eq, %157, %160 : vector<8x128xi32>
    %162 = arith.andi %159, %161 : vector<8x128xi1>
    %163 = arith.extui %162 : vector<8x128xi1> to vector<8x128xi32>
    %164 = arith.sitofp %163 : vector<8x128xi32> to vector<8x128xf32>
    %165 = vector.broadcast %44 : vector<1x1xf32> to vector<8x128xf32>
    %166 = arith.mulf %165, %164 : vector<8x128xf32>
    %c0_i32_66 = arith.constant 0 : i32
    %167 = vector.broadcast %c0_i32_66 : i32 to vector<8x128xi32>
    %168 = arith.cmpi eq, %156, %167 : vector<8x128xi32>
    %c1_i32 = arith.constant 1 : i32
    %169 = vector.broadcast %c1_i32 : i32 to vector<8x128xi32>
    %170 = arith.cmpi eq, %157, %169 : vector<8x128xi32>
    %171 = arith.andi %168, %170 : vector<8x128xi1>
    %172 = arith.extui %171 : vector<8x128xi1> to vector<8x128xi32>
    %173 = arith.sitofp %172 : vector<8x128xi32> to vector<8x128xf32>
    %174 = vector.broadcast %71 : vector<1x1xf32> to vector<8x128xf32>
    %175 = arith.mulf %174, %173 : vector<8x128xf32>
    %176 = arith.addf %166, %175 : vector<8x128xf32>
    %c0_i32_67 = arith.constant 0 : i32
    %177 = vector.broadcast %c0_i32_67 : i32 to vector<8x128xi32>
    %178 = arith.cmpi eq, %156, %177 : vector<8x128xi32>
    %c2_i32 = arith.constant 2 : i32
    %179 = vector.broadcast %c2_i32 : i32 to vector<8x128xi32>
    %180 = arith.cmpi eq, %157, %179 : vector<8x128xi32>
    %181 = arith.andi %178, %180 : vector<8x128xi1>
    %182 = arith.extui %181 : vector<8x128xi1> to vector<8x128xi32>
    %183 = arith.sitofp %182 : vector<8x128xi32> to vector<8x128xf32>
    %184 = vector.broadcast %113 : vector<1x1xf32> to vector<8x128xf32>
    %185 = arith.mulf %184, %183 : vector<8x128xf32>
    %186 = arith.addf %176, %185 : vector<8x128xf32>
    %c0_i32_68 = arith.constant 0 : i32
    %187 = vector.broadcast %c0_i32_68 : i32 to vector<8x128xi32>
    %188 = arith.cmpi eq, %156, %187 : vector<8x128xi32>
    %c3_i32 = arith.constant 3 : i32
    %189 = vector.broadcast %c3_i32 : i32 to vector<8x128xi32>
    %190 = arith.cmpi eq, %157, %189 : vector<8x128xi32>
    %191 = arith.andi %188, %190 : vector<8x128xi1>
    %192 = arith.extui %191 : vector<8x128xi1> to vector<8x128xi32>
    %193 = arith.sitofp %192 : vector<8x128xi32> to vector<8x128xf32>
    %194 = vector.broadcast %155 : vector<1x1xf32> to vector<8x128xf32>
    %195 = arith.mulf %194, %193 : vector<8x128xf32>
    %196 = arith.addf %186, %195 : vector<8x128xf32>
    %197 = vector.shape_cast %196 : vector<8x128xf32> to vector<1x8x128xf32>
    %c0_69 = arith.constant 0 : index
    %c0_70 = arith.constant 0 : index
    %c0_71 = arith.constant 0 : index
    %198 = vector.load %arg12[%c0_69, %c0_70, %c0_71] : memref<1x8x128xf32, #tpu.memory_space<vmem>>, vector<1x8x128xf32>
    tpu.vector_store %arg12[%c0_69, %c0_70, %c0_71], %197 {strides = array<i32>} : memref<1x8x128xf32, #tpu.memory_space<vmem>>, vector<1x8x128xf32>,
    return
  }
  func.func @transform_0(%arg0: i32) -> (i32, i32) {
    %c0_i32 = arith.constant 0 : i32
    %c0_i32_0 = arith.constant 0 : i32
    return %arg0, %c0_i32 : i32, i32
  }
  func.func @transform_1(%arg0: i32) -> (i32, i32) {
    %c0_i32 = arith.constant 0 : i32
    %c0_i32_0 = arith.constant 0 : i32
    return %arg0, %c0_i32 : i32, i32
  }
  func.func @transform_2(%arg0: i32) -> (i32, i32) {
    %c0_i32 = arith.constant 0 : i32
    %c0_i32_0 = arith.constant 0 : i32
    return %arg0, %c0_i32 : i32, i32
  }
  func.func @transform_3(%arg0: i32) -> (i32, i32) {
    %c0_i32 = arith.constant 0 : i32
    %c0_i32_0 = arith.constant 0 : i32
    return %arg0, %c0_i32 : i32, i32
  }
  func.func @transform_4(%arg0: i32) -> (i32, i32) {
    %c0_i32 = arith.constant 0 : i32
    %c0_i32_0 = arith.constant 0 : i32
    return %arg0, %c0_i32 : i32, i32
  }
  func.func @transform_5(%arg0: i32) -> (i32, i32) {
    %c0_i32 = arith.constant 0 : i32
    %c0_i32_0 = arith.constant 0 : i32
    return %arg0, %c0_i32 : i32, i32
  }
  func.func @transform_6(%arg0: i32) -> (i32, i32) {
    %c0_i32 = arith.constant 0 : i32
    %c0_i32_0 = arith.constant 0 : i32
    return %arg0, %c0_i32 : i32, i32
  }
  func.func @transform_7(%arg0: i32) -> (i32, i32) {
    %c0_i32 = arith.constant 0 : i32
    %c0_i32_0 = arith.constant 0 : i32
    return %arg0, %c0_i32 : i32, i32
  }
  func.func @transform_8(%arg0: i32) -> (i32, i32) {
    %c0_i32 = arith.constant 0 : i32
    %c0_i32_0 = arith.constant 0 : i32
    return %arg0, %c0_i32 : i32, i32
  }
  func.func @transform_9(%arg0: i32) -> (i32, i32) {
    %c0_i32 = arith.constant 0 : i32
    %c0_i32_0 = arith.constant 0 : i32
    %c0_i32_1 = arith.constant 0 : i32
    return %c0_i32, %c0_i32_0 : i32, i32
  }
  func.func @transform_10(%arg0: i32) -> (i32, i32) {
    %c0_i32 = arith.constant 0 : i32
    %c0_i32_0 = arith.constant 0 : i32
    %c0_i32_1 = arith.constant 0 : i32
    return %c0_i32, %c0_i32_0 : i32, i32
  }
  func.func @transform_11(%arg0: i32) -> (i32, i32, i32) {
    %c0_i32 = arith.constant 0 : i32
    %c0_i32_0 = arith.constant 0 : i32
    %c0_i32_1 = arith.constant 0 : i32
    return %arg0, %c0_i32, %c0_i32_0 : i32, i32, i32
  }
}

</mosaic_0001>

<llo_original>
// kernel: hmm_loss_forward.1
$region0: #{hmm_loss_forward.1}
  #allocation0 [shape = 'u32[]', space=smem, size = 0x4, offset = 0x4, fixed_abs, tag = 'smem constant byte address 0x4 - core index']
  #allocation1 [shape = 'u32[144,128]{1,0:T(1,128)}', space=vmem, size = 0x12000, scoped, tag = 'internal scratch']
  %s0 = inlined_call_operand.vmem [shape: f32[16,64], index: 0, kind: input, shape index: {}]
  %s1 = inlined_call_operand.vmem [shape: f32[16,64], index: 1, kind: input, shape index: {}]
  %s2 = inlined_call_operand.vmem [shape: f32[16,64], index: 2, kind: input, shape index: {}]
  %s3 = inlined_call_operand.vmem [shape: f32[16,16], index: 3, kind: input, shape index: {}]
  %s4 = inlined_call_operand.vmem [shape: f32[16,64], index: 4, kind: input, shape index: {}]
  %s5 = inlined_call_operand.vmem [shape: f32[16,64], index: 5, kind: input, shape index: {}]
  %s6 = inlined_call_operand.vmem [shape: f32[16,64], index: 6, kind: input, shape index: {}]
  %s7 = inlined_call_operand.vmem [shape: f32[16,64], index: 7, kind: input, shape index: {}]
  %s8 = inlined_call_operand.vmem [shape: f32[16,6], index: 8, kind: input, shape index: {}]
  %s9 = inlined_call_operand.vmem [shape: bf16[672,128], index: 9, kind: input, shape index: {}]
  %s10 = inlined_call_operand.vmem [shape: f32[8,128], index: 10, kind: input, shape index: {}]
  %s11 = inlined_call_operand.vmem [shape: f32[2,8,128], index: 11, kind: output, shape index: {}]
  %s12 = sld [smem:[#allocation0]]
  $region77: #{hmm_loss_forward.1} parent=0
    _
  %s14 = ssub.s32 1, %s12
  %s15 = scalar_select 0, %s14, %s12
  loop: start=0, step=1, limit=4
  $region2: #{hmm_loss_forward.1} parent=0 // loop_pre_header
    _
  $region3: #{hmm_loss_forward.1} parent=0 // loop_header
    %s17 = sphi 0, %s21
    %p18 = scmp.ge.s32.totalorder %s17, 4
    %s27 = sphi 0, %s29
    %s30 = sphi 0, %s27
    %s31 = sphi 0, %s30
    %s47 = sphi 0, %s31
    %s53 = sphi 0, %s55
    %s56 = sphi 0, %s53
    %s57 = sphi 0, %s56
    %s73 = sphi 0, %s57
    %s79 = sphi 0, %s81
    %s82 = sphi 0, %s79
    %s83 = sphi 0, %s82
    %s99 = sphi 0, %s83
    %s105 = sphi 0, %s107
    %s108 = sphi 0, %s105
    %s109 = sphi 0, %s108
    %s125 = sphi 0, %s109
    %s131 = sphi 0, %s133
    %s134 = sphi 0, %s131
    %s135 = sphi 0, %s134
    %s151 = sphi 0, %s135
    %s157 = sphi 0, %s159
    %s160 = sphi 0, %s157
    %s161 = sphi 0, %s160
    %s177 = sphi 0, %s161
    %s183 = sphi 0, %s185
    %s186 = sphi 0, %s183
    %s187 = sphi 0, %s186
    %s203 = sphi 0, %s187
    %s209 = sphi 0, %s211
    %s212 = sphi 0, %s209
    %s213 = sphi 0, %s212
    %s229 = sphi 0, %s213
    %s235 = sphi 0, %s237
    %s238 = sphi 0, %s235
    %s239 = sphi 0, %s238
    %s255 = sphi 0, %s239
    %s259 = sphi 0, %s259
    %s261 = sphi 0, %s259
    %s262 = sphi 0, %s261
    %s276 = sphi 0, %s262
    %s280 = sphi 0, %s280
    %s282 = sphi 0, %s280
    %s283 = sphi 0, %s282
    %s297 = sphi 0, %s283
    %s303 = sphi 0, %s305
    %s306 = sphi 0, %s303
    %s307 = sphi 0, %s306
    %s323 = sphi 0, %s307
  $region4: #{hmm_loss_forward.1} parent=0 // loop_header_branch
    %20 = sbr.rel (%p18) target = $region8
  $region5: #{hmm_loss_forward.1} parent=0 // loop_body
    %s22 = ssub.s32 %s17, 1
    %s23 = ssub.s32 %s17, 2
    %s24 = sadd.s32 %s17, 1
    %s25 = ssub.s32 %s17, %s24
    %p26 = scmp.eq.s32.totalorder %s25, 0
    %s28 = sadd.s32 %s27, 1
    %s29 = scalar_select %p26, %s27, %s28
    %p32 = pneg %p26
    %p33 = scmp.eq.s32.totalorder %s17, 1
    %p34 = por %p32, %p33
    %p35 = scmp.ne.s32.totalorder %s27, %s30
    %p36 = scmp.eq.s32.totalorder %s17, 0
    %p37 = por %p35, %p36
    %p38 = scmp.ne.s32.totalorder %s27, %s30
    %p39 = scmp.eq.s32.totalorder %s22, 1
    %p40 = por %p38, %p39
    %p41 = scmp.ne.s32.totalorder %s30, %s31
    %p42 = scmp.eq.s32.totalorder %s22, 0
    %p43 = por %p41, %p42
    %p44 = scmp.ne.s32.totalorder %s30, %s31
    %p45 = scmp.eq.s32.totalorder %s23, 1
    %p46 = por %p44, %p45
    %p48 = scmp.ne.s32.totalorder %s31, %s47
    %p49 = scmp.eq.s32.totalorder %s23, 0
    %p50 = por %p48, %p49
    %s51 = ssub.s32 %s17, %s24
    %p52 = scmp.eq.s32.totalorder %s51, 0
    %s54 = sadd.s32 %s53, 1
    %s55 = scalar_select %p52, %s53, %s54
    %p58 = pneg %p52
    %p59 = scmp.eq.s32.totalorder %s17, 1
    %p60 = por %p58, %p59
    %p61 = scmp.ne.s32.totalorder %s53, %s56
    %p62 = scmp.eq.s32.totalorder %s17, 0
    %p63 = por %p61, %p62
    %p64 = scmp.ne.s32.totalorder %s53, %s56
    %p65 = scmp.eq.s32.totalorder %s22, 1
    %p66 = por %p64, %p65
    %p67 = scmp.ne.s32.totalorder %s56, %s57
    %p68 = scmp.eq.s32.totalorder %s22, 0
    %p69 = por %p67, %p68
    %p70 = scmp.ne.s32.totalorder %s56, %s57
    %p71 = scmp.eq.s32.totalorder %s23, 1
    %p72 = por %p70, %p71
    %p74 = scmp.ne.s32.totalorder %s57, %s73
    %p75 = scmp.eq.s32.totalorder %s23, 0
    %p76 = por %p74, %p75
    %s77 = ssub.s32 %s17, %s24
    %p78 = scmp.eq.s32.totalorder %s77, 0
    %s80 = sadd.s32 %s79, 1
    %s81 = scalar_select %p78, %s79, %s80
    %p84 = pneg %p78
    %p85 = scmp.eq.s32.totalorder %s17, 1
    %p86 = por %p84, %p85
    %p87 = scmp.ne.s32.totalorder %s79, %s82
    %p88 = scmp.eq.s32.totalorder %s17, 0
    %p89 = por %p87, %p88
    %p90 = scmp.ne.s32.totalorder %s79, %s82
    %p91 = scmp.eq.s32.totalorder %s22, 1
    %p92 = por %p90, %p91
    %p93 = scmp.ne.s32.totalorder %s82, %s83
    %p94 = scmp.eq.s32.totalorder %s22, 0
    %p95 = por %p93, %p94
    %p96 = scmp.ne.s32.totalorder %s82, %s83
    %p97 = scmp.eq.s32.totalorder %s23, 1
    %p98 = por %p96, %p97
    %p100 = scmp.ne.s32.totalorder %s83, %s99
    %p101 = scmp.eq.s32.totalorder %s23, 0
    %p102 = por %p100, %p101
    %s103 = ssub.s32 %s17, %s24
    %p104 = scmp.eq.s32.totalorder %s103, 0
    %s106 = sadd.s32 %s105, 1
    %s107 = scalar_select %p104, %s105, %s106
    %p110 = pneg %p104
    %p111 = scmp.eq.s32.totalorder %s17, 1
    %p112 = por %p110, %p111
    %p113 = scmp.ne.s32.totalorder %s105, %s108
    %p114 = scmp.eq.s32.totalorder %s17, 0
    %p115 = por %p113, %p114
    %p116 = scmp.ne.s32.totalorder %s105, %s108
    %p117 = scmp.eq.s32.totalorder %s22, 1
    %p118 = por %p116, %p117
    %p119 = scmp.ne.s32.totalorder %s108, %s109
    %p120 = scmp.eq.s32.totalorder %s22, 0
    %p121 = por %p119, %p120
    %p122 = scmp.ne.s32.totalorder %s108, %s109
    %p123 = scmp.eq.s32.totalorder %s23, 1
    %p124 = por %p122, %p123
    %p126 = scmp.ne.s32.totalorder %s109, %s125
    %p127 = scmp.eq.s32.totalorder %s23, 0
    %p128 = por %p126, %p127
    %s129 = ssub.s32 %s17, %s24
    %p130 = scmp.eq.s32.totalorder %s129, 0
    %s132 = sadd.s32 %s131, 1
    %s133 = scalar_select %p130, %s131, %s132
    %p136 = pneg %p130
    %p137 = scmp.eq.s32.totalorder %s17, 1
    %p138 = por %p136, %p137
    %p139 = scmp.ne.s32.totalorder %s131, %s134
    %p140 = scmp.eq.s32.totalorder %s17, 0
    %p141 = por %p139, %p140
    %p142 = scmp.ne.s32.totalorder %s131, %s134
    %p143 = scmp.eq.s32.totalorder %s22, 1
    %p144 = por %p142, %p143
    %p145 = scmp.ne.s32.totalorder %s134, %s135
    %p146 = scmp.eq.s32.totalorder %s22, 0
    %p147 = por %p145, %p146
    %p148 = scmp.ne.s32.totalorder %s134, %s135
    %p149 = scmp.eq.s32.totalorder %s23, 1
    %p150 = por %p148, %p149
    %p152 = scmp.ne.s32.totalorder %s135, %s151
    %p153 = scmp.eq.s32.totalorder %s23, 0
    %p154 = por %p152, %p153
    %s155 = ssub.s32 %s17, %s24
    %p156 = scmp.eq.s32.totalorder %s155, 0
    %s158 = sadd.s32 %s157, 1
    %s159 = scalar_select %p156, %s157, %s158
    %p162 = pneg %p156
    %p163 = scmp.eq.s32.totalorder %s17, 1
    %p164 = por %p162, %p163
    %p165 = scmp.ne.s32.totalorder %s157, %s160
    %p166 = scmp.eq.s32.totalorder %s17, 0
    %p167 = por %p165, %p166
    %p168 = scmp.ne.s32.totalorder %s157, %s160
    %p169 = scmp.eq.s32.totalorder %s22, 1
    %p170 = por %p168, %p169
    %p171 = scmp.ne.s32.totalorder %s160, %s161
    %p172 = scmp.eq.s32.totalorder %s22, 0
    %p173 = por %p171, %p172
    %p174 = scmp.ne.s32.totalorder %s160, %s161
    %p175 = scmp.eq.s32.totalorder %s23, 1
    %p176 = por %p174, %p175
    %p178 = scmp.ne.s32.totalorder %s161, %s177
    %p179 = scmp.eq.s32.totalorder %s23, 0
    %p180 = por %p178, %p179
    %s181 = ssub.s32 %s17, %s24
    %p182 = scmp.eq.s32.totalorder %s181, 0
    %s184 = sadd.s32 %s183, 1
    %s185 = scalar_select %p182, %s183, %s184
    %p188 = pneg %p182
    %p189 = scmp.eq.s32.totalorder %s17, 1
    %p190 = por %p188, %p189
    %p191 = scmp.ne.s32.totalorder %s183, %s186
    %p192 = scmp.eq.s32.totalorder %s17, 0
    %p193 = por %p191, %p192
    %p194 = scmp.ne.s32.totalorder %s183, %s186
    %p195 = scmp.eq.s32.totalorder %s22, 1
    %p196 = por %p194, %p195
    %p197 = scmp.ne.s32.totalorder %s186, %s187
    %p198 = scmp.eq.s32.totalorder %s22, 0
    %p199 = por %p197, %p198
    %p200 = scmp.ne.s32.totalorder %s186, %s187
    %p201 = scmp.eq.s32.totalorder %s23, 1
    %p202 = por %p200, %p201
    %p204 = scmp.ne.s32.totalorder %s187, %s203
    %p205 = scmp.eq.s32.totalorder %s23, 0
    %p206 = por %p204, %p205
    %s207 = ssub.s32 %s17, %s24
    %p208 = scmp.eq.s32.totalorder %s207, 0
    %s210 = sadd.s32 %s209, 1
    %s211 = scalar_select %p208, %s209, %s210
    %p214 = pneg %p208
    %p215 = scmp.eq.s32.totalorder %s17, 1
    %p216 = por %p214, %p215
    %p217 = scmp.ne.s32.totalorder %s209, %s212
    %p218 = scmp.eq.s32.totalorder %s17, 0
    %p219 = por %p217, %p218
    %p220 = scmp.ne.s32.totalorder %s209, %s212
    %p221 = scmp.eq.s32.totalorder %s22, 1
    %p222 = por %p220, %p221
    %p223 = scmp.ne.s32.totalorder %s212, %s213
    %p224 = scmp.eq.s32.totalorder %s22, 0
    %p225 = por %p223, %p224
    %p226 = scmp.ne.s32.totalorder %s212, %s213
    %p227 = scmp.eq.s32.totalorder %s23, 1
    %p228 = por %p226, %p227
    %p230 = scmp.ne.s32.totalorder %s213, %s229
    %p231 = scmp.eq.s32.totalorder %s23, 0
    %p232 = por %p230, %p231
    %s233 = ssub.s32 %s17, %s24
    %p234 = scmp.eq.s32.totalorder %s233, 0
    %s236 = sadd.s32 %s235, 1
    %s237 = scalar_select %p234, %s235, %s236
    %p240 = pneg %p234
    %p241 = scmp.eq.s32.totalorder %s17, 1
    %p242 = por %p240, %p241
    %p243 = scmp.ne.s32.totalorder %s235, %s238
    %p244 = scmp.eq.s32.totalorder %s17, 0
    %p245 = por %p243, %p244
    %p246 = scmp.ne.s32.totalorder %s235, %s238
    %p247 = scmp.eq.s32.totalorder %s22, 1
    %p248 = por %p246, %p247
    %p249 = scmp.ne.s32.totalorder %s238, %s239
    %p250 = scmp.eq.s32.totalorder %s22, 0
    %p251 = por %p249, %p250
    %p252 = scmp.ne.s32.totalorder %s238, %s239
    %p253 = scmp.eq.s32.totalorder %s23, 1
    %p254 = por %p252, %p253
    %p256 = scmp.ne.s32.totalorder %s239, %s255
    %p257 = scmp.eq.s32.totalorder %s23, 0
    %p258 = por %p256, %p257
    %s260 = sadd.s32 %s259, 1
    %p263 = scmp.eq.s32.totalorder %s17, 1
    %p264 = scmp.ne.s32.totalorder %s259, %s261
    %p265 = scmp.eq.s32.totalorder %s17, 0
    %p266 = por %p264, %p265
    %p267 = scmp.ne.s32.totalorder %s259, %s261
    %p268 = scmp.eq.s32.totalorder %s22, 1
    %p269 = por %p267, %p268
    %p270 = scmp.ne.s32.totalorder %s261, %s262
    %p271 = scmp.eq.s32.totalorder %s22, 0
    %p272 = por %p270, %p271
    %p273 = scmp.ne.s32.totalorder %s261, %s262
    %p274 = scmp.eq.s32.totalorder %s23, 1
    %p275 = por %p273, %p274
    %p277 = scmp.ne.s32.totalorder %s262, %s276
    %p278 = scmp.eq.s32.totalorder %s23, 0
    %p279 = por %p277, %p278
    %s281 = sadd.s32 %s280, 1
    %p284 = scmp.eq.s32.totalorder %s17, 1
    %p285 = scmp.ne.s32.totalorder %s280, %s282
    %p286 = scmp.eq.s32.totalorder %s17, 0
    %p287 = por %p285, %p286
    %p288 = scmp.ne.s32.totalorder %s280, %s282
    %p289 = scmp.eq.s32.totalorder %s22, 1
    %p290 = por %p288, %p289
    %p291 = scmp.ne.s32.totalorder %s282, %s283
    %p292 = scmp.eq.s32.totalorder %s22, 0
    %p293 = por %p291, %p292
    %p294 = scmp.ne.s32.totalorder %s282, %s283
    %p295 = scmp.eq.s32.totalorder %s23, 1
    %p296 = por %p294, %p295
    %p298 = scmp.ne.s32.totalorder %s283, %s297
    %p299 = scmp.eq.s32.totalorder %s23, 0
    %p300 = por %p298, %p299
    %s301 = ssub.s32 %s17, %s24
    %p302 = scmp.eq.s32.totalorder %s301, 0
    %s304 = sadd.s32 %s303, 1
    %s305 = scalar_select %p302, %s303, %s304
    %p308 = pneg %p302
    %p309 = scmp.eq.s32.totalorder %s17, 1
    %p310 = por %p308, %p309
    %p311 = scmp.ne.s32.totalorder %s303, %s306
    %p312 = scmp.eq.s32.totalorder %s17, 0
    %p313 = por %p311, %p312
    %p314 = scmp.ne.s32.totalorder %s303, %s306
    %p315 = scmp.eq.s32.totalorder %s22, 1
    %p316 = por %p314, %p315
    %p317 = scmp.ne.s32.totalorder %s306, %s307
    %p318 = scmp.eq.s32.totalorder %s22, 0
    %p319 = por %p317, %p318
    %p320 = scmp.ne.s32.totalorder %s306, %s307
    %p321 = scmp.eq.s32.totalorder %s23, 1
    %p322 = por %p320, %p321
    %p324 = scmp.ne.s32.totalorder %s307, %s323
    %p325 = scmp.eq.s32.totalorder %s23, 0
    %p326 = por %p324, %p325
    %p327 = scmp.le.s32.totalorder 1, %s17
    %p328 = scmp.lt.s32.totalorder %s17, 3
    %p329 = pnand %p327, %p328
    %p330 = pneg %p329
    // Predicated region
    $region9: #{hmm_loss_forward.1} parent=5 // pred_check
      _
    $region10: #{hmm_loss_forward.1} parent=5 // pred_check_branch
      %332 = sbr.rel (%p329) target = $region12
    $region11: #{hmm_loss_forward.1} parent=5 // pred_region
      %s333 = ssub.s32 %s17, 1
      // Predicated region
      $region13: #{hmm_loss_forward.1} parent=11 // pred_check
        %p334 = pneg %p272
      $region14: #{hmm_loss_forward.1} parent=11 // pred_check_branch
        %336 = sbr.rel (%p334) target = $region16
      $region15: #{hmm_loss_forward.1} parent=11 // pred_region
        _
      $region16: #{hmm_loss_forward.1} parent=11 // pred_fallthru
        _
      // Predicated region
      $region17: #{hmm_loss_forward.1} parent=11 // pred_check
        %p337 = pneg %p293
      $region18: #{hmm_loss_forward.1} parent=11 // pred_check_branch
        %339 = sbr.rel (%p337) target = $region20
      $region19: #{hmm_loss_forward.1} parent=11 // pred_region
        _
      $region20: #{hmm_loss_forward.1} parent=11 // pred_fallthru
        _
    $region12: #{hmm_loss_forward.1} parent=5 // pred_fallthru
      _
    %p340 = scmp.lt.s32.totalorder %s17, 2
    // Predicated region
    $region21: #{hmm_loss_forward.1} parent=5 // pred_check
      %p341 = pneg %p340
    $region22: #{hmm_loss_forward.1} parent=5 // pred_check_branch
      %343 = sbr.rel (%p341) target = $region24
    $region23: #{hmm_loss_forward.1} parent=5 // pred_region
      // Predicated region
      $region25: #{hmm_loss_forward.1} parent=23 // pred_check
        %p344 = pneg %p37
      $region26: #{hmm_loss_forward.1} parent=23 // pred_check_branch
        %346 = sbr.rel (%p344) target = $region28
      $region27: #{hmm_loss_forward.1} parent=23 // pred_region
        %p347 = scmp.lt.s32.totalorder %s17, 1
        %s348 = scalar_select %p347, %s17, 1
        %s349 = smul.addr %s348, 8
        %s350 = scalar_lea.vmem %s0, %s349
      $region28: #{hmm_loss_forward.1} parent=23 // pred_fallthru
        _
      // Predicated region
      $region29: #{hmm_loss_forward.1} parent=23 // pred_check
        %p351 = pneg %p63
      $region30: #{hmm_loss_forward.1} parent=23 // pred_check_branch
        %353 = sbr.rel (%p351) target = $region32
      $region31: #{hmm_loss_forward.1} parent=23 // pred_region
        %p354 = scmp.lt.s32.totalorder %s17, 1
        %s355 = scalar_select %p354, %s17, 1
        %s356 = smul.addr %s355, 8
        %s357 = scalar_lea.vmem %s1, %s356
      $region32: #{hmm_loss_forward.1} parent=23 // pred_fallthru
        _
      // Predicated region
      $region33: #{hmm_loss_forward.1} parent=23 // pred_check
        %p358 = pneg %p89
      $region34: #{hmm_loss_forward.1} parent=23 // pred_check_branch
        %360 = sbr.rel (%p358) target = $region36
      $region35: #{hmm_loss_forward.1} parent=23 // pred_region
        %p361 = scmp.lt.s32.totalorder %s17, 1
        %s362 = scalar_select %p361, %s17, 1
        %s363 = smul.addr %s362, 8
        %s364 = scalar_lea.vmem %s2, %s363
      $region36: #{hmm_loss_forward.1} parent=23 // pred_fallthru
        _
      // Predicated region
      $region37: #{hmm_loss_forward.1} parent=23 // pred_check
        %p365 = pneg %p115
      $region38: #{hmm_loss_forward.1} parent=23 // pred_check_branch
        %367 = sbr.rel (%p365) target = $region40
      $region39: #{hmm_loss_forward.1} parent=23 // pred_region
        %p368 = scmp.lt.s32.totalorder %s17, 1
        %s369 = scalar_select %p368, %s17, 1
        %s370 = smul.addr %s369, 8
        %s371 = scalar_lea.vmem %s3, %s370
      $region40: #{hmm_loss_forward.1} parent=23 // pred_fallthru
        _
      // Predicated region
      $region41: #{hmm_loss_forward.1} parent=23 // pred_check
        %p372 = pneg %p141
      $region42: #{hmm_loss_forward.1} parent=23 // pred_check_branch
        %374 = sbr.rel (%p372) target = $region44
      $region43: #{hmm_loss_forward.1} parent=23 // pred_region
        %p375 = scmp.lt.s32.totalorder %s17, 1
        %s376 = scalar_select %p375, %s17, 1
        %s377 = smul.addr %s376, 8
        %s378 = scalar_lea.vmem %s4, %s377
      $region44: #{hmm_loss_forward.1} parent=23 // pred_fallthru
        _
      // Predicated region
      $region45: #{hmm_loss_forward.1} parent=23 // pred_check
        %p379 = pneg %p167
      $region46: #{hmm_loss_forward.1} parent=23 // pred_check_branch
        %381 = sbr.rel (%p379) target = $region48
      $region47: #{hmm_loss_forward.1} parent=23 // pred_region
        %p382 = scmp.lt.s32.totalorder %s17, 1
        %s383 = scalar_select %p382, %s17, 1
        %s384 = smul.addr %s383, 8
        %s385 = scalar_lea.vmem %s5, %s384
      $region48: #{hmm_loss_forward.1} parent=23 // pred_fallthru
        _
      // Predicated region
      $region49: #{hmm_loss_forward.1} parent=23 // pred_check
        %p386 = pneg %p193
      $region50: #{hmm_loss_forward.1} parent=23 // pred_check_branch
        %388 = sbr.rel (%p386) target = $region52
      $region51: #{hmm_loss_forward.1} parent=23 // pred_region
        %p389 = scmp.lt.s32.totalorder %s17, 1
        %s390 = scalar_select %p389, %s17, 1
        %s391 = smul.addr %s390, 8
        %s392 = scalar_lea.vmem %s6, %s391
      $region52: #{hmm_loss_forward.1} parent=23 // pred_fallthru
        _
      // Predicated region
      $region53: #{hmm_loss_forward.1} parent=23 // pred_check
        %p393 = pneg %p219
      $region54: #{hmm_loss_forward.1} parent=23 // pred_check_branch
        %395 = sbr.rel (%p393) target = $region56
      $region55: #{hmm_loss_forward.1} parent=23 // pred_region
        %p396 = scmp.lt.s32.totalorder %s17, 1
        %s397 = scalar_select %p396, %s17, 1
        %s398 = smul.addr %s397, 8
        %s399 = scalar_lea.vmem %s7, %s398
      $region56: #{hmm_loss_forward.1} parent=23 // pred_fallthru
        _
      // Predicated region
      $region57: #{hmm_loss_forward.1} parent=23 // pred_check
        %p400 = pneg %p245
      $region58: #{hmm_loss_forward.1} parent=23 // pred_check_branch
        %402 = sbr.rel (%p400) target = $region60
      $region59: #{hmm_loss_forward.1} parent=23 // pred_region
        %p403 = scmp.lt.s32.totalorder %s17, 1
        %s404 = scalar_select %p403, %s17, 1
        %s405 = smul.addr %s404, 8
        %s406 = scalar_lea.vmem %s8, %s405
      $region60: #{hmm_loss_forward.1} parent=23 // pred_fallthru
        _
    $region24: #{hmm_loss_forward.1} parent=5 // pred_fallthru
      _
    %p407 = scmp.le.s32.totalorder 1, %s17
    %p408 = scmp.lt.s32.totalorder %s17, 3
    %p409 = pnand %p407, %p408
    %p410 = pneg %p409
    // Predicated region
    $region61: #{hmm_loss_forward.1} parent=5 // pred_check
      _
    $region62: #{hmm_loss_forward.1} parent=5 // pred_check_branch
      %412 = sbr.rel (%p409) target = $region64
    $region63: #{hmm_loss_forward.1} parent=5 // pred_region
      %s413 = ssub.s32 %s17, 1
      %p414 = scmp.lt.s32.totalorder %s22, 1
      %s415 = scalar_select %p414, %s22, 1
      %s416 = smul.addr %s415, 8
      %s417 = scalar_lea.vmem %s0, %s416
      %p418 = pneg %p43
      %p419 = pneg %p40
      %p420 = scmp.lt.s32.totalorder %s22, 1
      %s421 = scalar_select %p420, %s22, 1
      %s422 = smul.addr %s421, 8
      %s423 = scalar_lea.vmem %s1, %s422
      %p424 = pneg %p69
      %p425 = pneg %p66
      %p426 = scmp.lt.s32.totalorder %s22, 1
      %s427 = scalar_select %p426, %s22, 1
      %s428 = smul.addr %s427, 8
      %s429 = scalar_lea.vmem %s2, %s428
      %p430 = pneg %p95
      %p431 = pneg %p92
      %p432 = scmp.lt.s32.totalorder %s22, 1
      %s433 = scalar_select %p432, %s22, 1
      %s434 = smul.addr %s433, 8
      %s435 = scalar_lea.vmem %s3, %s434
      %p436 = pneg %p121
      %p437 = pneg %p118
      %p438 = scmp.lt.s32.totalorder %s22, 1
      %s439 = scalar_select %p438, %s22, 1
      %s440 = smul.addr %s439, 8
      %s441 = scalar_lea.vmem %s4, %s440
      %p442 = pneg %p147
      %p443 = pneg %p144
      %p444 = scmp.lt.s32.totalorder %s22, 1
      %s445 = scalar_select %p444, %s22, 1
      %s446 = smul.addr %s445, 8
      %s447 = scalar_lea.vmem %s5, %s446
      %p448 = pneg %p173
      %p449 = pneg %p170
      %p450 = scmp.lt.s32.totalorder %s22, 1
      %s451 = scalar_select %p450, %s22, 1
      %s452 = smul.addr %s451, 8
      %s453 = scalar_lea.vmem %s6, %s452
      %p454 = pneg %p199
      %p455 = pneg %p196
      %p456 = scmp.lt.s32.totalorder %s22, 1
      %s457 = scalar_select %p456, %s22, 1
      %s458 = smul.addr %s457, 8
      %s459 = scalar_lea.vmem %s7, %s458
      %p460 = pneg %p225
      %p461 = pneg %p222
      %p462 = scmp.lt.s32.totalorder %s22, 1
      %s463 = scalar_select %p462, %s22, 1
      %s464 = smul.addr %s463, 8
      %s465 = scalar_lea.vmem %s8, %s464
      %p466 = pneg %p251
      %p467 = pneg %p248
      %p468 = pneg %p272
      %p469 = pneg %p269
      %p470 = pneg %p293
      %p471 = pneg %p290
      %p472 = pneg %p319
      %p473 = pneg %p316
      %p474 = scmp.lt.s32.totalorder %s22, 1
      %s475 = scalar_select %p474, %s22, 1
      %s476 = smul.addr %s475, 8
      %s477 = scalar_lea.vmem %s11, %s476
      %p478 = scmp.lt.s32.totalorder %s22, 1
      %s479 = scalar_select %p478, %s22, 1
      %s480 = smul.addr %s479, 8
      %s481 = scalar_lea.vmem %s0, %s480
      %p482 = scmp.lt.s32.totalorder %s22, 1
      %s483 = scalar_select %p482, %s22, 1
      %s484 = smul.addr %s483, 8
      %s485 = scalar_lea.vmem %s1, %s484
      %p486 = scmp.lt.s32.totalorder %s22, 1
      %s487 = scalar_select %p486, %s22, 1
      %s488 = smul.addr %s487, 8
      %s489 = scalar_lea.vmem %s2, %s488
      %p490 = scmp.lt.s32.totalorder %s22, 1
      %s491 = scalar_select %p490, %s22, 1
      %s492 = smul.addr %s491, 8
      %s493 = scalar_lea.vmem %s3, %s492
      %p494 = scmp.lt.s32.totalorder %s22, 1
      %s495 = scalar_select %p494, %s22, 1
      %s496 = smul.addr %s495, 8
      %s497 = scalar_lea.vmem %s4, %s496
      %p498 = scmp.lt.s32.totalorder %s22, 1
      %s499 = scalar_select %p498, %s22, 1
      %s500 = smul.addr %s499, 8
      %s501 = scalar_lea.vmem %s5, %s500
      %p502 = scmp.lt.s32.totalorder %s22, 1
      %s503 = scalar_select %p502, %s22, 1
      %s504 = smul.addr %s503, 8
      %s505 = scalar_lea.vmem %s6, %s504
      %p506 = scmp.lt.s32.totalorder %s22, 1
      %s507 = scalar_select %p506, %s22, 1
      %s508 = smul.addr %s507, 8
      %s509 = scalar_lea.vmem %s7, %s508
      %p510 = scmp.lt.s32.totalorder %s22, 1
      %s511 = scalar_select %p510, %s22, 1
      %s512 = smul.addr %s511, 8
      %s513 = scalar_lea.vmem %s8, %s512
      %p514 = scmp.lt.s32.totalorder %s22, 1
      %s515 = scalar_select %p514, %s22, 1
      %s516 = smul.addr %s515, 8
      %s517 = scalar_lea.vmem %s11, %s516
      %s519 = smul.u32 %s22, 8
      %v520 = vlaneseq
      %v521 = vshrl.u32 %v520, 7
      %v522 = vstv %s519
      %v523 = vadd.s32 %v522, %v521
      %vm524 = vcmp.lt.s32.totalorder %v523, 16
      %v525 = vld [vmem:[%s513] sm:$0xff]
      %v526 = vld [vmem:[%s481] sm:$0xff]
      %v527 = vpack.c.bf16 %v526, %v526
      %v528 = vld [vmem:[%s9] sm:$0xf]
      %v529 = vld [vmem:[%s9 + $0x4] sm:$0xf]
      %v530 = vld [vmem:[%s9 + $0x8] sm:$0xf]
      %v531 = vld [vmem:[%s9 + $0xc] sm:$0xf]
      %v532 = vld [vmem:[%s9 + $0x10] sm:$0xf]
      %v533 = vld [vmem:[%s9 + $0x14] sm:$0xf]
      %v534 = vld [vmem:[%s9 + $0x18] sm:$0xf]
      %v535 = vld [vmem:[%s9 + $0x1c] sm:$0xf]
      %v536 = vld [vmem:[%s10] sm:$0x1]
      %v537 = vlaneseq
      %v538 = vshrl.u32 %v537, 7
      %v539 = vsub.s32 0, %v538
      %v540 = vrot.slane %v536, %v539
      %v549 = vunpack.c.l.b16 %v528
      %v550 = vunpack.c.l.b16 %v529
      %v551 = vunpack.c.l.b16 %v530
      %v552 = vunpack.c.l.b16 %v531
      %v553 = vunpack.c.l.b16 %v532
      %v554 = vunpack.c.l.b16 %v533
      %v555 = vunpack.c.l.b16 %v534
      %v556 = vunpack.c.l.b16 %v535
      %v557 = vpack.c.b16 %v550, %v549
      %v558 = vpack.c.b16 %v552, %v551
      %v559 = vpack.c.b16 %v554, %v553
      %v560 = vpack.c.b16 %v556, %v555
      %vm565 = vcmask 523264
      %v567 = vsel %vm565, %v527, 0
      %569 = vmatprep.subr.bf16.mxu0 0
      %570 = vmatpush1.bf16.msra.mxu0 %v557
      %571 = vmatprep.subr.bf16.mxu0 0
      %572 = vmatpush1.bf16.msra.mxu0 %v558
      %573 = vmatprep.subr.bf16.mxu0 0
      %574 = vmatpush1.bf16.msra.mxu0 %v559
      %575 = vmatprep.subr.bf16.mxu0 0
      %576 = vmatpush1.bf16.msra.mxu0 %v560
      %577 = vmatprep.subr.bf16.mxu0 0
      %578 = vmatpush1.bf16.msra.mxu0 0
      %579 = vmatprep.subr.bf16.mxu0 0
      %580 = vmatpush1.bf16.msra.mxu0 0
      %581 = vmatprep.subr.bf16.mxu0 0
      %582 = vmatpush1.bf16.msra.mxu0 0
      %583 = vmatprep.subr.bf16.mxu0 0
      %584 = vmatpush1.bf16.msra.mxu0 0
      %585 = vmatprep.subr.bf16.mxu0 0
      %586 = vmatpush1.bf16.msra.mxu0 0
      %587 = vmatprep.subr.bf16.mxu0 0
      %588 = vmatpush1.bf16.msra.mxu0 0
      %589 = vmatprep.subr.bf16.mxu0 0
      %590 = vmatpush1.bf16.msra.mxu0 0
      %591 = vmatprep.subr.bf16.mxu0 0
      %592 = vmatpush1.bf16.msra.mxu0 0
      %593 = vmatprep.subr.bf16.mxu0 0
      %594 = vmatpush1.bf16.msra.mxu0 0
      %595 = vmatprep.subr.bf16.mxu0 0
      %596 = vmatpush1.bf16.msra.mxu0 0
      %597 = vmatprep.subr.bf16.mxu0 0
      %598 = vmatpush1.bf16.msra.mxu0 0
      %599 = vmatprep.subr.bf16.mxu0 0
      %600 = vmatpush1.bf16.msra.mxu0 0
      %601 = vmatprep.mubr.bf16.mxu0 0
      %602 = vmatmul.mubr.bf16.gmra.mrb[0].mxu0 %v567
      %v603 = vpop.f32.mrb[0].mxu0
      %v604 = vadd.f32 %v540, %v603
      %v605 = vpop.f32.mrb[0].mxu0
      %v606 = vpop.f32.mrb[0].mxu0
      %v607 = vpop.f32.mrb[0].mxu0
      %608 = vdwg.mxu0
      %v609 = vmax.f32 %v604, 0.0
      %v610 = vpack.c.bf16 %v609, %v609
      %v611 = vld [vmem:[%s9 + $0x20] sm:$0xf]
      %v612 = vld [vmem:[%s9 + $0x24] sm:$0xf]
      %v613 = vld [vmem:[%s9 + $0x28] sm:$0xf]
      %v614 = vld [vmem:[%s9 + $0x2c] sm:$0xf]
      %v615 = vld [vmem:[%s9 + $0x30] sm:$0xf]
      %v616 = vld [vmem:[%s9 + $0x34] sm:$0xf]
      %v617 = vld [vmem:[%s9 + $0x38] sm:$0xf]
      %v618 = vld [vmem:[%s9 + $0x3c] sm:$0xf]
      %v619 = vld [vmem:[%s9 + $0x40] sm:$0xf]
      %v620 = vld [vmem:[%s9 + $0x44] sm:$0xf]
      %v621 = vld [vmem:[%s9 + $0x48] sm:$0xf]
      %v622 = vld [vmem:[%s9 + $0x4c] sm:$0xf]
      %v623 = vld [vmem:[%s9 + $0x50] sm:$0xf]
      %v624 = vld [vmem:[%s9 + $0x54] sm:$0xf]
      %v625 = vld [vmem:[%s9 + $0x58] sm:$0xf]
      %v626 = vld [vmem:[%s9 + $0x5c] sm:$0xf]
      %v627 = vld [vmem:[%s10 + $0x1] sm:$0x1]
      %v628 = vlaneseq
      %v629 = vshrl.u32 %v628, 7
      %v630 = vsub.s32 0, %v629
      %v631 = vrot.slane %v627, %v630
      %v648 = vunpack.c.l.b16 %v611
      %v649 = vunpack.c.l.b16 %v612
      %v650 = vunpack.c.l.b16 %v613
      %v651 = vunpack.c.l.b16 %v614
      %v652 = vunpack.c.l.b16 %v615
      %v653 = vunpack.c.l.b16 %v616
      %v654 = vunpack.c.l.b16 %v617
      %v655 = vunpack.c.l.b16 %v618
      %v656 = vunpack.c.l.b16 %v619
      %v657 = vunpack.c.l.b16 %v620
      %v658 = vunpack.c.l.b16 %v621
      %v659 = vunpack.c.l.b16 %v622
      %v660 = vunpack.c.l.b16 %v623
      %v661 = vunpack.c.l.b16 %v624
      %v662 = vunpack.c.l.b16 %v625
      %v663 = vunpack.c.l.b16 %v626
      %v664 = vpack.c.b16 %v649, %v648
      %v665 = vpack.c.b16 %v651, %v650
      %v666 = vpack.c.b16 %v653, %v652
      %v667 = vpack.c.b16 %v655, %v654
      %v668 = vpack.c.b16 %v657, %v656
      %v669 = vpack.c.b16 %v659, %v658
      %v670 = vpack.c.b16 %v661, %v660
      %v671 = vpack.c.b16 %v663, %v662
      %680 = vmatprep.subr.bf16.mxu0 0
      %681 = vmatpush1.bf16.msra.mxu0 %v664
      %682 = vmatprep.subr.bf16.mxu0 0
      %683 = vmatpush1.bf16.msra.mxu0 %v665
      %684 = vmatprep.subr.bf16.mxu0 0
      %685 = vmatpush1.bf16.msra.mxu0 %v666
      %686 = vmatprep.subr.bf16.mxu0 0
      %687 = vmatpush1.bf16.msra.mxu0 %v667
      %688 = vmatprep.subr.bf16.mxu0 0
      %689 = vmatpush1.bf16.msra.mxu0 %v668
      %690 = vmatprep.subr.bf16.mxu0 0
      %691 = vmatpush1.bf16.msra.mxu0 %v669
      %692 = vmatprep.subr.bf16.mxu0 0
      %693 = vmatpush1.bf16.msra.mxu0 %v670
      %694 = vmatprep.subr.bf16.mxu0 0
      %695 = vmatpush1.bf16.msra.mxu0 %v671
      %696 = vmatprep.subr.bf16.mxu0 0
      %697 = vmatpush1.bf16.msra.mxu0 0
      %698 = vmatprep.subr.bf16.mxu0 0
      %699 = vmatpush1.bf16.msra.mxu0 0
      %700 = vmatprep.subr.bf16.mxu0 0
      %701 = vmatpush1.bf16.msra.mxu0 0
      %702 = vmatprep.subr.bf16.mxu0 0
      %703 = vmatpush1.bf16.msra.mxu0 0
      %704 = vmatprep.subr.bf16.mxu0 0
      %705 = vmatpush1.bf16.msra.mxu0 0
      %706 = vmatprep.subr.bf16.mxu0 0
      %707 = vmatpush1.bf16.msra.mxu0 0
      %708 = vmatprep.subr.bf16.mxu0 0
      %709 = vmatpush1.bf16.msra.mxu0 0
      %710 = vmatprep.subr.bf16.mxu0 0
      %711 = vmatpush1.bf16.msra.mxu0 0
      %712 = vmatprep.mubr.bf16.mxu0 0
      %713 = vmatmul.mubr.bf16.gmra.mrb[0].mxu0 %v610
      %v714 = vpop.f32.mrb[0].mxu0
      %v715 = vadd.f32 %v631, %v714
      %v716 = vpop.f32.mrb[0].mxu0
      %v717 = vpop.f32.mrb[0].mxu0
      %v718 = vpop.f32.mrb[0].mxu0
      %719 = vdwg.mxu0
      %v720 = vld [vmem:[%s485] sm:$0xff]
      %v721 = vadd.f32 %v715, 1.837877
      %v722 = vsub.f32 %v720, %v715
      %v723 = vmul.f32 %v722, %v722
      %v724 = vsub.f32 0.0, %v715
      %v725 = vmul.f32 %v724, 1.442695
      %v726 = vpow.pop %v725
      %728 = vrot.lane.b32.xlu0 %v726, 64
      %v729 = vpop.permute.xlu0 %728
      %v731 = vmul.f32 %v723, %v729
      %733 = vrot.lane.b32.xlu0 %v731, 64
      %v734 = vpop.permute.xlu0 %733
      %v736 = vadd.f32 %v721, %v734
      %v737 = vsel %vm524, 1, 0
      %vm738 = vcmp.eq.s32.totalorder %v737, 1
      %v739 = vsel %vm738, %v736, 0.0
      %741 = vrot.lane.b32.xlu0 %v739, 64
      %v742 = vpop.permute.xlu0 %741
      %v744 = vsel %vm565, %v742, 0.0
      %745 = vadd.xlane.f32.xlu0 %v744
      %v746 = vpop.xlane.xlu0 %745
      %v747 = vrot.slane %v746, 4
      %v748 = vadd.f32 %v746, %v747
      %v749 = vrot.slane %v748, 2
      %v750 = vadd.f32 %v748, %v749
      %v751 = vrot.slane %v750, 1
      %v752 = vadd.f32 %v750, %v751
      %s753 = vtos %v752
      %v754 = vstv %s753
      %v755 = vmul.f32 %v754, 0.5
      %v756 = vld [vmem:[%s489] sm:$0xff]
      %v757 = vpack.c.bf16 %v756, %v756
      %v758 = vld [vmem:[%s9 + $0x130] sm:$0xf]
      %v759 = vld [vmem:[%s9 + $0x134] sm:$0xf]
      %v760 = vld [vmem:[%s9 + $0x138] sm:$0xf]
      %v761 = vld [vmem:[%s9 + $0x13c] sm:$0xf]
      %v762 = vld [vmem:[%s9 + $0x140] sm:$0xf]
      %v763 = vld [vmem:[%s9 + $0x144] sm:$0xf]
      %v764 = vld [vmem:[%s9 + $0x148] sm:$0xf]
      %v765 = vld [vmem:[%s9 + $0x14c] sm:$0xf]
      %v766 = vld [vmem:[%s10 + $0x6] sm:$0x1]
      %v767 = vlaneseq
      %v768 = vshrl.u32 %v767, 7
      %v769 = vsub.s32 0, %v768
      %v770 = vrot.slane %v766, %v769
      %v779 = vunpack.c.l.b16 %v758
      %v780 = vunpack.c.l.b16 %v759
      %v781 = vunpack.c.l.b16 %v760
      %v782 = vunpack.c.l.b16 %v761
      %v783 = vunpack.c.l.b16 %v762
      %v784 = vunpack.c.l.b16 %v763
      %v785 = vunpack.c.l.b16 %v764
      %v786 = vunpack.c.l.b16 %v765
      %v787 = vpack.c.b16 %v780, %v779
      %v788 = vpack.c.b16 %v782, %v781
      %v789 = vpack.c.b16 %v784, %v783
      %v790 = vpack.c.b16 %v786, %v785
      %v796 = vsel %vm565, %v757, 0
      %798 = vmatprep.subr.bf16.mxu0 0
      %799 = vmatpush1.bf16.msra.mxu0 %v787
      %800 = vmatprep.subr.bf16.mxu0 0
      %801 = vmatpush1.bf16.msra.mxu0 %v788
      %802 = vmatprep.subr.bf16.mxu0 0
      %803 = vmatpush1.bf16.msra.mxu0 %v789
      %804 = vmatprep.subr.bf16.mxu0 0
      %805 = vmatpush1.bf16.msra.mxu0 %v790
      %806 = vmatprep.subr.bf16.mxu0 0
      %807 = vmatpush1.bf16.msra.mxu0 0
      %808 = vmatprep.subr.bf16.mxu0 0
      %809 = vmatpush1.bf16.msra.mxu0 0
      %810 = vmatprep.subr.bf16.mxu0 0
      %811 = vmatpush1.bf16.msra.mxu0 0
      %812 = vmatprep.subr.bf16.mxu0 0
      %813 = vmatpush1.bf16.msra.mxu0 0
      %814 = vmatprep.subr.bf16.mxu0 0
      %815 = vmatpush1.bf16.msra.mxu0 0
      %816 = vmatprep.subr.bf16.mxu0 0
      %817 = vmatpush1.bf16.msra.mxu0 0
      %818 = vmatprep.subr.bf16.mxu0 0
      %819 = vmatpush1.bf16.msra.mxu0 0
      %820 = vmatprep.subr.bf16.mxu0 0
      %821 = vmatpush1.bf16.msra.mxu0 0
      %822 = vmatprep.subr.bf16.mxu0 0
      %823 = vmatpush1.bf16.msra.mxu0 0
      %824 = vmatprep.subr.bf16.mxu0 0
      %825 = vmatpush1.bf16.msra.mxu0 0
      %826 = vmatprep.subr.bf16.mxu0 0
      %827 = vmatpush1.bf16.msra.mxu0 0
      %828 = vmatprep.subr.bf16.mxu0 0
      %829 = vmatpush1.bf16.msra.mxu0 0
      %830 = vmatprep.mubr.bf16.mxu0 0
      %831 = vmatmul.mubr.bf16.gmra.mrb[0].mxu0 %v796
      %v832 = vpop.f32.mrb[0].mxu0
      %v833 = vadd.f32 %v770, %v832
      %v834 = vpop.f32.mrb[0].mxu0
      %v835 = vpop.f32.mrb[0].mxu0
      %v836 = vpop.f32.mrb[0].mxu0
      %837 = vdwg.mxu0
      %v838 = vld [vmem:[%s493] sm:$0xff]
      %v839 = vmax.f32 %v833, 0.0
      %v840 = vmul.f32 %v833, %v838
      %v841 = vsub.f32 %v839, %v840
      %v842 = vand.u32 2147483647, %v833
      %v843 = vsub.f32 0.0, %v842
      %v844 = vmul.f32 %v843, 1.442695
      %v845 = vpow.pop %v844
      %v846 = vadd.f32 %v845, 1.0
      %v847 = vlog2.pop %v846
      %v848 = vmul.f32 %v847, 0.6931472
      %v849 = vmul.f32 -0.5, %v845
      %v850 = vadd.f32 %v849, 1.0
      %v851 = vmul.f32 %v850, %v845
      %v852 = vand.u32 2147483647, %v845
      %vm853 = vcmp.lt.f32.partialorder %v852, 0.0004427343
      %v854 = vsel %vm853, %v851, %v848
      %v855 = vadd.f32 %v841, %v854
      %v856 = vsel %vm738, %v855, 0.0
      %vm857 = vcmask 130048
      %v858 = vsel %vm857, %v856, 0.0
      %859 = vadd.xlane.f32.xlu0 %v858
      %v860 = vpop.xlane.xlu0 %859
      %v861 = vrot.slane %v860, 4
      %v862 = vadd.f32 %v860, %v861
      %v863 = vrot.slane %v862, 2
      %v864 = vadd.f32 %v862, %v863
      %v865 = vrot.slane %v864, 1
      %v866 = vadd.f32 %v864, %v865
      %s867 = vtos %v866
      %v868 = vld [vmem:[%s497] sm:$0xff]
      %v869 = vpack.c.bf16 %v868, %v868
      %v870 = vld [vmem:[%s9 + $0x60] sm:$0xf]
      %v871 = vld [vmem:[%s9 + $0x64] sm:$0xf]
      %v872 = vld [vmem:[%s9 + $0x68] sm:$0xf]
      %v873 = vld [vmem:[%s9 + $0x6c] sm:$0xf]
      %v874 = vld [vmem:[%s9 + $0x70] sm:$0xf]
      %v875 = vld [vmem:[%s9 + $0x74] sm:$0xf]
      %v876 = vld [vmem:[%s9 + $0x78] sm:$0xf]
      %v877 = vld [vmem:[%s9 + $0x7c] sm:$0xf]
      %v878 = vpack.c.bf16 %v525, %v525
      %v879 = vld [vmem:[%s9 + $0x80] sm:$0x7]
      %vm880 = vcmask 48128
      %v882 = vsel %vm880, %v878, 0
      %vm884 = vcmask 1042432
      %v886 = vsel %vm884, %v879, 0
      %888 = vmatprep.subr.bf16.mxu0 0
      %889 = vmatpush1.bf16.msra.mxu0 %v886
      %890 = vmatprep.subr.bf16.mxu0 0
      %891 = vmatpush1.bf16.msra.mxu0 0
      %892 = vmatprep.subr.bf16.mxu0 0
      %893 = vmatpush1.bf16.msra.mxu0 0
      %894 = vmatprep.subr.bf16.mxu0 0
      %895 = vmatpush1.bf16.msra.mxu0 0
      %896 = vmatprep.subr.bf16.mxu0 0
      %897 = vmatpush1.bf16.msra.mxu0 0
      %898 = vmatprep.subr.bf16.mxu0 0
      %899 = vmatpush1.bf16.msra.mxu0 0
      %900 = vmatprep.subr.bf16.mxu0 0
      %901 = vmatpush1.bf16.msra.mxu0 0
      %902 = vmatprep.subr.bf16.mxu0 0
      %903 = vmatpush1.bf16.msra.mxu0 0
      %904 = vmatprep.subr.bf16.mxu0 0
      %905 = vmatpush1.bf16.msra.mxu0 0
      %906 = vmatprep.subr.bf16.mxu0 0
      %907 = vmatpush1.bf16.msra.mxu0 0
      %908 = vmatprep.subr.bf16.mxu0 0
      %909 = vmatpush1.bf16.msra.mxu0 0
      %910 = vmatprep.subr.bf16.mxu0 0
      %911 = vmatpush1.bf16.msra.mxu0 0
      %912 = vmatprep.subr.bf16.mxu0 0
      %913 = vmatpush1.bf16.msra.mxu0 0
      %914 = vmatprep.subr.bf16.mxu0 0
      %915 = vmatpush1.bf16.msra.mxu0 0
      %916 = vmatprep.subr.bf16.mxu0 0
      %917 = vmatpush1.bf16.msra.mxu0 0
      %918 = vmatprep.subr.bf16.mxu0 0
      %919 = vmatpush1.bf16.msra.mxu0 0
      %920 = vmatprep.mubr.bf16.mxu0 0
      %921 = vmatmul.mubr.bf16.gmra.mrb[0].mxu0 %v882
      %v922 = vpop.f32.mrb[0].mxu0
      %v923 = vadd.f32 0.0, %v922
      %v924 = vpop.f32.mrb[0].mxu0
      %v925 = vpop.f32.mrb[0].mxu0
      %v926 = vpop.f32.mrb[0].mxu0
      %927 = vdwg.mxu0
      %v936 = vunpack.c.l.b16 %v870
      %v937 = vunpack.c.l.b16 %v871
      %v938 = vunpack.c.l.b16 %v872
      %v939 = vunpack.c.l.b16 %v873
      %v940 = vunpack.c.l.b16 %v874
      %v941 = vunpack.c.l.b16 %v875
      %v942 = vunpack.c.l.b16 %v876
      %v943 = vunpack.c.l.b16 %v877
      %v944 = vpack.c.b16 %v937, %v936
      %v945 = vpack.c.b16 %v939, %v938
      %v946 = vpack.c.b16 %v941, %v940
      %v947 = vpack.c.b16 %v943, %v942
      %v953 = vsel %vm565, %v869, 0
      %955 = vmatprep.subr.bf16.mxu0 0
      %956 = vmatpush1.bf16.msra.mxu0 %v944
      %957 = vmatprep.subr.bf16.mxu0 0
      %958 = vmatpush1.bf16.msra.mxu0 %v945
      %959 = vmatprep.subr.bf16.mxu0 0
      %960 = vmatpush1.bf16.msra.mxu0 %v946
      %961 = vmatprep.subr.bf16.mxu0 0
      %962 = vmatpush1.bf16.msra.mxu0 %v947
      %963 = vmatprep.subr.bf16.mxu0 0
      %964 = vmatpush1.bf16.msra.mxu0 0
      %965 = vmatprep.subr.bf16.mxu0 0
      %966 = vmatpush1.bf16.msra.mxu0 0
      %967 = vmatprep.subr.bf16.mxu0 0
      %968 = vmatpush1.bf16.msra.mxu0 0
      %969 = vmatprep.subr.bf16.mxu0 0
      %970 = vmatpush1.bf16.msra.mxu0 0
      %971 = vmatprep.subr.bf16.mxu0 0
      %972 = vmatpush1.bf16.msra.mxu0 0
      %973 = vmatprep.subr.bf16.mxu0 0
      %974 = vmatpush1.bf16.msra.mxu0 0
      %975 = vmatprep.subr.bf16.mxu0 0
      %976 = vmatpush1.bf16.msra.mxu0 0
      %977 = vmatprep.subr.bf16.mxu0 0
      %978 = vmatpush1.bf16.msra.mxu0 0
      %979 = vmatprep.subr.bf16.mxu0 0
      %980 = vmatpush1.bf16.msra.mxu0 0
      %981 = vmatprep.subr.bf16.mxu0 0
      %982 = vmatpush1.bf16.msra.mxu0 0
      %983 = vmatprep.subr.bf16.mxu0 0
      %984 = vmatpush1.bf16.msra.mxu0 0
      %985 = vmatprep.subr.bf16.mxu0 0
      %986 = vmatpush1.bf16.msra.mxu0 0
      %987 = vmatprep.mubr.bf16.mxu0 0
      %988 = vmatmul.mubr.bf16.gmra.mrb[0].mxu0 %v953
      %v989 = vpop.f32.mrb[0].mxu0
      %v990 = vadd.f32 %v923, %v989
      %v991 = vpop.f32.mrb[0].mxu0
      %v992 = vpop.f32.mrb[0].mxu0
      %v993 = vpop.f32.mrb[0].mxu0
      %994 = vdwg.mxu0
      %v995 = vld [vmem:[%s10 + $0x2] sm:$0x1]
      %v996 = vlaneseq
      %v997 = vshrl.u32 %v996, 7
      %v998 = vsub.s32 0, %v997
      %v999 = vrot.slane %v995, %v998
      %v1000 = vadd.f32 %v990, %v999
      %v1001 = vmax.f32 %v1000, 0.0
      %v1002 = vpack.c.bf16 %v1001, %v1001
      %v1003 = vld [vmem:[%s9 + $0x88] sm:$0xf]
      %v1004 = vld [vmem:[%s9 + $0x8c] sm:$0xf]
      %v1005 = vld [vmem:[%s9 + $0x90] sm:$0xf]
      %v1006 = vld [vmem:[%s9 + $0x94] sm:$0xf]
      %v1007 = vld [vmem:[%s9 + $0x98] sm:$0xf]
      %v1008 = vld [vmem:[%s9 + $0x9c] sm:$0xf]
      %v1009 = vld [vmem:[%s9 + $0xa0] sm:$0xf]
      %v1010 = vld [vmem:[%s9 + $0xa4] sm:$0xf]
      %v1011 = vld [vmem:[%s9 + $0xa8] sm:$0xf]
      %v1012 = vld [vmem:[%s9 + $0xac] sm:$0xf]
      %v1013 = vld [vmem:[%s9 + $0xb0] sm:$0xf]
      %v1014 = vld [vmem:[%s9 + $0xb4] sm:$0xf]
      %v1015 = vld [vmem:[%s9 + $0xb8] sm:$0xf]
      %v1016 = vld [vmem:[%s9 + $0xbc] sm:$0xf]
      %v1017 = vld [vmem:[%s9 + $0xc0] sm:$0xf]
      %v1018 = vld [vmem:[%s9 + $0xc4] sm:$0xf]
      %v1019 = vld [vmem:[%s10 + $0x3] sm:$0x1]
      %v1020 = vlaneseq
      %v1021 = vshrl.u32 %v1020, 7
      %v1022 = vsub.s32 0, %v1021
      %v1023 = vrot.slane %v1019, %v1022
      %v1040 = vunpack.c.l.b16 %v1003
      %v1041 = vunpack.c.l.b16 %v1004
      %v1042 = vunpack.c.l.b16 %v1005
      %v1043 = vunpack.c.l.b16 %v1006
      %v1044 = vunpack.c.l.b16 %v1007
      %v1045 = vunpack.c.l.b16 %v1008
      %v1046 = vunpack.c.l.b16 %v1009
      %v1047 = vunpack.c.l.b16 %v1010
      %v1048 = vunpack.c.l.b16 %v1011
      %v1049 = vunpack.c.l.b16 %v1012
      %v1050 = vunpack.c.l.b16 %v1013
      %v1051 = vunpack.c.l.b16 %v1014
      %v1052 = vunpack.c.l.b16 %v1015
      %v1053 = vunpack.c.l.b16 %v1016
      %v1054 = vunpack.c.l.b16 %v1017
      %v1055 = vunpack.c.l.b16 %v1018
      %v1056 = vpack.c.b16 %v1041, %v1040
      %v1057 = vpack.c.b16 %v1043, %v1042
      %v1058 = vpack.c.b16 %v1045, %v1044
      %v1059 = vpack.c.b16 %v1047, %v1046
      %v1060 = vpack.c.b16 %v1049, %v1048
      %v1061 = vpack.c.b16 %v1051, %v1050
      %v1062 = vpack.c.b16 %v1053, %v1052
      %v1063 = vpack.c.b16 %v1055, %v1054
      %1072 = vmatprep.subr.bf16.mxu0 0
      %1073 = vmatpush1.bf16.msra.mxu0 %v1056
      %1074 = vmatprep.subr.bf16.mxu0 0
      %1075 = vmatpush1.bf16.msra.mxu0 %v1057
      %1076 = vmatprep.subr.bf16.mxu0 0
      %1077 = vmatpush1.bf16.msra.mxu0 %v1058
      %1078 = vmatprep.subr.bf16.mxu0 0
      %1079 = vmatpush1.bf16.msra.mxu0 %v1059
      %1080 = vmatprep.subr.bf16.mxu0 0
      %1081 = vmatpush1.bf16.msra.mxu0 %v1060
      %1082 = vmatprep.subr.bf16.mxu0 0
      %1083 = vmatpush1.bf16.msra.mxu0 %v1061
      %1084 = vmatprep.subr.bf16.mxu0 0
      %1085 = vmatpush1.bf16.msra.mxu0 %v1062
      %1086 = vmatprep.subr.bf16.mxu0 0
      %1087 = vmatpush1.bf16.msra.mxu0 %v1063
      %1088 = vmatprep.subr.bf16.mxu0 0
      %1089 = vmatpush1.bf16.msra.mxu0 0
      %1090 = vmatprep.subr.bf16.mxu0 0
      %1091 = vmatpush1.bf16.msra.mxu0 0
      %1092 = vmatprep.subr.bf16.mxu0 0
      %1093 = vmatpush1.bf16.msra.mxu0 0
      %1094 = vmatprep.subr.bf16.mxu0 0
      %1095 = vmatpush1.bf16.msra.mxu0 0
      %1096 = vmatprep.subr.bf16.mxu0 0
      %1097 = vmatpush1.bf16.msra.mxu0 0
      %1098 = vmatprep.subr.bf16.mxu0 0
      %1099 = vmatpush1.bf16.msra.mxu0 0
      %1100 = vmatprep.subr.bf16.mxu0 0
      %1101 = vmatpush1.bf16.msra.mxu0 0
      %1102 = vmatprep.subr.bf16.mxu0 0
      %1103 = vmatpush1.bf16.msra.mxu0 0
      %1104 = vmatprep.mubr.bf16.mxu0 0
      %1105 = vmatmul.mubr.bf16.gmra.mrb[0].mxu0 %v1002
      %v1106 = vpop.f32.mrb[0].mxu0
      %v1107 = vadd.f32 %v1023, %v1106
      %v1108 = vpop.f32.mrb[0].mxu0
      %v1109 = vpop.f32.mrb[0].mxu0
      %v1110 = vpop.f32.mrb[0].mxu0
      %1111 = vdwg.mxu0
      %v1112 = vsub.f32 0.0, %v1107
      %v1113 = vmul.f32 %v1107, 1.442695
      %v1114 = vpow.pop %v1113
      %v1115 = vld [vmem:[%s501] sm:$0xff]
      %v1116 = vsub.f32 %v1107, %v1115
      %v1117 = vmul.f32 %v1116, %v1116
      %1119 = vrot.lane.b32.xlu0 %v1117, 64
      %v1120 = vpop.permute.xlu0 %1119
      %v1122 = vadd.f32 %v1114, %v1120
      %v1123 = vmul.f32 %v1122, 0.5
      %v1124 = vadd.f32 %v1112, %v1123
      %v1125 = vsub.f32 %v1124, 0.5
      %v1126 = vsel %vm738, %v1125, 0.0
      %1128 = vrot.lane.b32.xlu0 %v1126, 64
      %v1129 = vpop.permute.xlu0 %1128
      %v1131 = vsel %vm565, %v1129, 0.0
      %1132 = vadd.xlane.f32.xlu0 %v1131
      %v1133 = vpop.xlane.xlu0 %1132
      %v1134 = vrot.slane %v1133, 4
      %v1135 = vadd.f32 %v1133, %v1134
      %v1136 = vrot.slane %v1135, 2
      %v1137 = vadd.f32 %v1135, %v1136
      %v1138 = vrot.slane %v1137, 1
      %v1139 = vadd.f32 %v1137, %v1138
      %s1140 = vtos %v1139
      %v1141 = vld [vmem:[%s505] sm:$0xff]
      %v1142 = vpack.c.bf16 %v1141, %v1141
      %v1143 = vld [vmem:[%s9 + $0xc8] sm:$0xf]
      %v1144 = vld [vmem:[%s9 + $0xcc] sm:$0xf]
      %v1145 = vld [vmem:[%s9 + $0xd0] sm:$0xf]
      %v1146 = vld [vmem:[%s9 + $0xd4] sm:$0xf]
      %v1147 = vld [vmem:[%s9 + $0xd8] sm:$0xf]
      %v1148 = vld [vmem:[%s9 + $0xdc] sm:$0xf]
      %v1149 = vld [vmem:[%s9 + $0xe0] sm:$0xf]
      %v1150 = vld [vmem:[%s9 + $0xe4] sm:$0xf]
      %v1151 = vld [vmem:[%s9 + $0xe8] sm:$0x7]
      %v1153 = vsel %vm884, %v1151, 0
      %1155 = vmatprep.subr.bf16.mxu0 0
      %1156 = vmatpush1.bf16.msra.mxu0 %v1153
      %1157 = vmatprep.subr.bf16.mxu0 0
      %1158 = vmatpush1.bf16.msra.mxu0 0
      %1159 = vmatprep.subr.bf16.mxu0 0
      %1160 = vmatpush1.bf16.msra.mxu0 0
      %1161 = vmatprep.subr.bf16.mxu0 0
      %1162 = vmatpush1.bf16.msra.mxu0 0
      %1163 = vmatprep.subr.bf16.mxu0 0
      %1164 = vmatpush1.bf16.msra.mxu0 0
      %1165 = vmatprep.subr.bf16.mxu0 0
      %1166 = vmatpush1.bf16.msra.mxu0 0
      %1167 = vmatprep.subr.bf16.mxu0 0
      %1168 = vmatpush1.bf16.msra.mxu0 0
      %1169 = vmatprep.subr.bf16.mxu0 0
      %1170 = vmatpush1.bf16.msra.mxu0 0
      %1171 = vmatprep.subr.bf16.mxu0 0
      %1172 = vmatpush1.bf16.msra.mxu0 0
      %1173 = vmatprep.subr.bf16.mxu0 0
      %1174 = vmatpush1.bf16.msra.mxu0 0
      %1175 = vmatprep.subr.bf16.mxu0 0
      %1176 = vmatpush1.bf16.msra.mxu0 0
      %1177 = vmatprep.subr.bf16.mxu0 0
      %1178 = vmatpush1.bf16.msra.mxu0 0
      %1179 = vmatprep.subr.bf16.mxu0 0
      %1180 = vmatpush1.bf16.msra.mxu0 0
      %1181 = vmatprep.subr.bf16.mxu0 0
      %1182 = vmatpush1.bf16.msra.mxu0 0
      %1183 = vmatprep.subr.bf16.mxu0 0
      %1184 = vmatpush1.bf16.msra.mxu0 0
      %1185 = vmatprep.subr.bf16.mxu0 0
      %1186 = vmatpush1.bf16.msra.mxu0 0
      %1187 = vmatprep.mubr.bf16.mxu0 0
      %1188 = vmatmul.mubr.bf16.gmra.mrb[0].mxu0 %v882
      %v1189 = vpop.f32.mrb[0].mxu0
      %v1190 = vadd.f32 0.0, %v1189
      %v1191 = vpop.f32.mrb[0].mxu0
      %v1192 = vpop.f32.mrb[0].mxu0
      %v1193 = vpop.f32.mrb[0].mxu0
      %1194 = vdwg.mxu0
      %v1203 = vunpack.c.l.b16 %v1143
      %v1204 = vunpack.c.l.b16 %v1144
      %v1205 = vunpack.c.l.b16 %v1145
      %v1206 = vunpack.c.l.b16 %v1146
      %v1207 = vunpack.c.l.b16 %v1147
      %v1208 = vunpack.c.l.b16 %v1148
      %v1209 = vunpack.c.l.b16 %v1149
      %v1210 = vunpack.c.l.b16 %v1150
      %v1211 = vpack.c.b16 %v1204, %v1203
      %v1212 = vpack.c.b16 %v1206, %v1205
      %v1213 = vpack.c.b16 %v1208, %v1207
      %v1214 = vpack.c.b16 %v1210, %v1209
      %v1220 = vsel %vm565, %v1142, 0
      %1222 = vmatprep.subr.bf16.mxu0 0
      %1223 = vmatpush1.bf16.msra.mxu0 %v1211
      %1224 = vmatprep.subr.bf16.mxu0 0
      %1225 = vmatpush1.bf16.msra.mxu0 %v1212
      %1226 = vmatprep.subr.bf16.mxu0 0
      %1227 = vmatpush1.bf16.msra.mxu0 %v1213
      %1228 = vmatprep.subr.bf16.mxu0 0
      %1229 = vmatpush1.bf16.msra.mxu0 %v1214
      %1230 = vmatprep.subr.bf16.mxu0 0
      %1231 = vmatpush1.bf16.msra.mxu0 0
      %1232 = vmatprep.subr.bf16.mxu0 0
      %1233 = vmatpush1.bf16.msra.mxu0 0
      %1234 = vmatprep.subr.bf16.mxu0 0
      %1235 = vmatpush1.bf16.msra.mxu0 0
      %1236 = vmatprep.subr.bf16.mxu0 0
      %1237 = vmatpush1.bf16.msra.mxu0 0
      %1238 = vmatprep.subr.bf16.mxu0 0
      %1239 = vmatpush1.bf16.msra.mxu0 0
      %1240 = vmatprep.subr.bf16.mxu0 0
      %1241 = vmatpush1.bf16.msra.mxu0 0
      %1242 = vmatprep.subr.bf16.mxu0 0
      %1243 = vmatpush1.bf16.msra.mxu0 0
      %1244 = vmatprep.subr.bf16.mxu0 0
      %1245 = vmatpush1.bf16.msra.mxu0 0
      %1246 = vmatprep.subr.bf16.mxu0 0
      %1247 = vmatpush1.bf16.msra.mxu0 0
      %1248 = vmatprep.subr.bf16.mxu0 0
      %1249 = vmatpush1.bf16.msra.mxu0 0
      %1250 = vmatprep.subr.bf16.mxu0 0
      %1251 = vmatpush1.bf16.msra.mxu0 0
      %1252 = vmatprep.subr.bf16.mxu0 0
      %1253 = vmatpush1.bf16.msra.mxu0 0
      %1254 = vmatprep.mubr.bf16.mxu0 0
      %1255 = vmatmul.mubr.bf16.gmra.mrb[0].mxu0 %v1220
      %v1256 = vpop.f32.mrb[0].mxu0
      %v1257 = vadd.f32 %v1190, %v1256
      %v1258 = vpop.f32.mrb[0].mxu0
      %v1259 = vpop.f32.mrb[0].mxu0
      %v1260 = vpop.f32.mrb[0].mxu0
      %1261 = vdwg.mxu0
      %v1262 = vld [vmem:[%s10 + $0x4] sm:$0x1]
      %v1263 = vlaneseq
      %v1264 = vshrl.u32 %v1263, 7
      %v1265 = vsub.s32 0, %v1264
      %v1266 = vrot.slane %v1262, %v1265
      %v1267 = vadd.f32 %v1257, %v1266
      %v1268 = vmax.f32 %v1267, 0.0
      %v1269 = vpack.c.bf16 %v1268, %v1268
      %v1270 = vld [vmem:[%s9 + $0xf0] sm:$0xf]
      %v1271 = vld [vmem:[%s9 + $0xf4] sm:$0xf]
      %v1272 = vld [vmem:[%s9 + $0xf8] sm:$0xf]
      %v1273 = vld [vmem:[%s9 + $0xfc] sm:$0xf]
      %v1274 = vld [vmem:[%s9 + $0x100] sm:$0xf]
      %v1275 = vld [vmem:[%s9 + $0x104] sm:$0xf]
      %v1276 = vld [vmem:[%s9 + $0x108] sm:$0xf]
      %v1277 = vld [vmem:[%s9 + $0x10c] sm:$0xf]
      %v1278 = vld [vmem:[%s9 + $0x110] sm:$0xf]
      %v1279 = vld [vmem:[%s9 + $0x114] sm:$0xf]
      %v1280 = vld [vmem:[%s9 + $0x118] sm:$0xf]
      %v1281 = vld [vmem:[%s9 + $0x11c] sm:$0xf]
      %v1282 = vld [vmem:[%s9 + $0x120] sm:$0xf]
      %v1283 = vld [vmem:[%s9 + $0x124] sm:$0xf]
      %v1284 = vld [vmem:[%s9 + $0x128] sm:$0xf]
      %v1285 = vld [vmem:[%s9 + $0x12c] sm:$0xf]
      %v1286 = vld [vmem:[%s10 + $0x5] sm:$0x1]
      %v1287 = vlaneseq
      %v1288 = vshrl.u32 %v1287, 7
      %v1289 = vsub.s32 0, %v1288
      %v1290 = vrot.slane %v1286, %v1289
      %v1307 = vunpack.c.l.b16 %v1270
      %v1308 = vunpack.c.l.b16 %v1271
      %v1309 = vunpack.c.l.b16 %v1272
      %v1310 = vunpack.c.l.b16 %v1273
      %v1311 = vunpack.c.l.b16 %v1274
      %v1312 = vunpack.c.l.b16 %v1275
      %v1313 = vunpack.c.l.b16 %v1276
      %v1314 = vunpack.c.l.b16 %v1277
      %v1315 = vunpack.c.l.b16 %v1278
      %v1316 = vunpack.c.l.b16 %v1279
      %v1317 = vunpack.c.l.b16 %v1280
      %v1318 = vunpack.c.l.b16 %v1281
      %v1319 = vunpack.c.l.b16 %v1282
      %v1320 = vunpack.c.l.b16 %v1283
      %v1321 = vunpack.c.l.b16 %v1284
      %v1322 = vunpack.c.l.b16 %v1285
      %v1323 = vpack.c.b16 %v1308, %v1307
      %v1324 = vpack.c.b16 %v1310, %v1309
      %v1325 = vpack.c.b16 %v1312, %v1311
      %v1326 = vpack.c.b16 %v1314, %v1313
      %v1327 = vpack.c.b16 %v1316, %v1315
      %v1328 = vpack.c.b16 %v1318, %v1317
      %v1329 = vpack.c.b16 %v1320, %v1319
      %v1330 = vpack.c.b16 %v1322, %v1321
      %1339 = vmatprep.subr.bf16.mxu0 0
      %1340 = vmatpush1.bf16.msra.mxu0 %v1323
      %1341 = vmatprep.subr.bf16.mxu0 0
      %1342 = vmatpush1.bf16.msra.mxu0 %v1324
      %1343 = vmatprep.subr.bf16.mxu0 0
      %1344 = vmatpush1.bf16.msra.mxu0 %v1325
      %1345 = vmatprep.subr.bf16.mxu0 0
      %1346 = vmatpush1.bf16.msra.mxu0 %v1326
      %1347 = vmatprep.subr.bf16.mxu0 0
      %1348 = vmatpush1.bf16.msra.mxu0 %v1327
      %1349 = vmatprep.subr.bf16.mxu0 0
      %1350 = vmatpush1.bf16.msra.mxu0 %v1328
      %1351 = vmatprep.subr.bf16.mxu0 0
      %1352 = vmatpush1.bf16.msra.mxu0 %v1329
      %1353 = vmatprep.subr.bf16.mxu0 0
      %1354 = vmatpush1.bf16.msra.mxu0 %v1330
      %1355 = vmatprep.subr.bf16.mxu0 0
      %1356 = vmatpush1.bf16.msra.mxu0 0
      %1357 = vmatprep.subr.bf16.mxu0 0
      %1358 = vmatpush1.bf16.msra.mxu0 0
      %1359 = vmatprep.subr.bf16.mxu0 0
      %1360 = vmatpush1.bf16.msra.mxu0 0
      %1361 = vmatprep.subr.bf16.mxu0 0
      %1362 = vmatpush1.bf16.msra.mxu0 0
      %1363 = vmatprep.subr.bf16.mxu0 0
      %1364 = vmatpush1.bf16.msra.mxu0 0
      %1365 = vmatprep.subr.bf16.mxu0 0
      %1366 = vmatpush1.bf16.msra.mxu0 0
      %1367 = vmatprep.subr.bf16.mxu0 0
      %1368 = vmatpush1.bf16.msra.mxu0 0
      %1369 = vmatprep.subr.bf16.mxu0 0
      %1370 = vmatpush1.bf16.msra.mxu0 0
      %1371 = vmatprep.mubr.bf16.mxu0 0
      %1372 = vmatmul.mubr.bf16.gmra.mrb[0].mxu0 %v1269
      %v1373 = vpop.f32.mrb[0].mxu0
      %v1374 = vadd.f32 %v1290, %v1373
      %v1375 = vpop.f32.mrb[0].mxu0
      %v1376 = vpop.f32.mrb[0].mxu0
      %v1377 = vpop.f32.mrb[0].mxu0
      %1378 = vdwg.mxu0
      %v1379 = vsub.f32 0.0, %v1374
      %v1380 = vmul.f32 %v1374, 1.442695
      %v1381 = vpow.pop %v1380
      %v1382 = vld [vmem:[%s509] sm:$0xff]
      %v1383 = vsub.f32 %v1374, %v1382
      %v1384 = vmul.f32 %v1383, %v1383
      %1386 = vrot.lane.b32.xlu0 %v1384, 64
      %v1387 = vpop.permute.xlu0 %1386
      %v1389 = vadd.f32 %v1381, %v1387
      %v1390 = vmul.f32 %v1389, 0.5
      %v1391 = vadd.f32 %v1379, %v1390
      %v1392 = vsub.f32 %v1391, 0.5
      %v1393 = vsel %vm738, %v1392, 0.0
      %1395 = vrot.lane.b32.xlu0 %v1393, 64
      %v1396 = vpop.permute.xlu0 %1395
      %v1398 = vsel %vm565, %v1396, 0.0
      %1399 = vadd.xlane.f32.xlu0 %v1398
      %v1400 = vpop.xlane.xlu0 %1399
      %v1401 = vrot.slane %v1400, 4
      %v1402 = vadd.f32 %v1400, %v1401
      %v1403 = vrot.slane %v1402, 2
      %v1404 = vadd.f32 %v1402, %v1403
      %v1405 = vrot.slane %v1404, 1
      %v1406 = vadd.f32 %v1404, %v1405
      %s1407 = vtos %v1406
      %v1408 = vlaneseq
      %v1409 = vand.u32 %v1408, 127
      %vm1410 = vcmp.eq.s32.totalorder %v521, 0
      %vm1411 = vcmp.eq.s32.totalorder %v1409, 0
      %vm1412 = vmand %vm1410, %vm1411
      %v1413 = vsel %vm1412, 1, 0
      %v1414 = vcvt.s32.f32 %v1413
      %v1415 = vmul.f32 %v755, %v1414
      %vm1416 = vcmp.eq.s32.totalorder %v1409, 1
      %vm1417 = vmand %vm1410, %vm1416
      %v1418 = vsel %vm1417, 1, 0
      %v1419 = vcvt.s32.f32 %v1418
      %v1420 = vstv %s867
      %v1421 = vmul.f32 %v1420, %v1419
      %v1422 = vadd.f32 %v1415, %v1421
      %vm1423 = vcmp.eq.s32.totalorder %v1409, 2
      %vm1424 = vmand %vm1410, %vm1423
      %v1425 = vsel %vm1424, 1, 0
      %v1426 = vcvt.s32.f32 %v1425
      %v1427 = vstv %s1140
      %v1428 = vmul.f32 %v1427, %v1426
      %v1429 = vadd.f32 %v1422, %v1428
      %vm1430 = vcmp.eq.s32.totalorder %v1409, 3
      %vm1431 = vmand %vm1410, %vm1430
      %v1432 = vsel %vm1431, 1, 0
      %v1433 = vcvt.s32.f32 %v1432
      %v1434 = vstv %s1407
      %v1435 = vmul.f32 %v1434, %v1433
      %v1436 = vadd.f32 %v1429, %v1435
      %1437 = vst [vmem:[%s517] sm:$0xff] %v1436
      %p1438 = scmp.lt.s32.totalorder %s22, 1
      %s1439 = scalar_select %p1438, %s22, 1
      %s1440 = smul.addr %s1439, 8
      %s1441 = scalar_lea.vmem %s11, %s1440
      // Predicated region
      $region65: #{hmm_loss_forward.1} parent=63 // pred_check
        %p1442 = pneg %p316
      $region66: #{hmm_loss_forward.1} parent=63 // pred_check_branch
        %1444 = sbr.rel (%p1442) target = $region68
      $region67: #{hmm_loss_forward.1} parent=63 // pred_region
        _
      $region68: #{hmm_loss_forward.1} parent=63 // pred_fallthru
        _
    $region64: #{hmm_loss_forward.1} parent=5 // pred_fallthru
      _
    %p1445 = scmp.le.s32.totalorder 2, %s17
    // Predicated region
    $region69: #{hmm_loss_forward.1} parent=5 // pred_check
      %p1446 = pneg %p1445
    $region70: #{hmm_loss_forward.1} parent=5 // pred_check_branch
      %1448 = sbr.rel (%p1446) target = $region72
    $region71: #{hmm_loss_forward.1} parent=5 // pred_region
      %s1449 = ssub.s32 %s17, 2
      // Predicated region
      $region73: #{hmm_loss_forward.1} parent=71 // pred_check
        %p1450 = pneg %p322
      $region74: #{hmm_loss_forward.1} parent=71 // pred_check_branch
        %1452 = sbr.rel (%p1450) target = $region76
      $region75: #{hmm_loss_forward.1} parent=71 // pred_region
        %p1453 = scmp.lt.s32.totalorder %s23, 1
        %s1454 = scalar_select %p1453, %s23, 1
        %s1455 = smul.addr %s1454, 8
        %s1456 = scalar_lea.vmem %s11, %s1455
      $region76: #{hmm_loss_forward.1} parent=71 // pred_fallthru
        _
    $region72: #{hmm_loss_forward.1} parent=5 // pred_fallthru
      _
  $region6: #{hmm_loss_forward.1} parent=0 // loop_footer
    %s21 = sadd.s32 1, %s17
  $region7: #{hmm_loss_forward.1} parent=0 // loop_footer_branch
    %16 = sbr.rel target = $region3
  $region8: #{hmm_loss_forward.1} parent=0 // loop_exit
    _

</llo_original>
